<compile_context>
chip_gen: v7x
topology: tpu7x:2x2x1
jax: 0.10.0
libtpu: 0.0.40
codegen_flags: <defaults>
</compile_context>

<pallas_src>
import jax
import jax.numpy as jnp
from jax.experimental import pallas as pl
from jax.experimental.pallas import tpu as pltpu

C_IN, C_MID, C_OUT = 72, 24, 144
BN_EPS = 1e-5


def fused_kernel(x_ref, r_ref, w1s_ref, w2_ref, b2_ref, o_ref):
    # x_ref  : (1, 72, TS)   input tile   (channels on sublanes, spatial on lanes)
    # r_ref  : (1, 24, TS)   residual tile
    # w1s_ref: (24, 72)      conv2d11 weight with BN scale folded in
    # w2_ref : (144, 24)     conv2d12 weight
    # b2_ref : (144, 1)      BN bias folded through conv2d12
    # o_ref  : (1, 144, TS)  output tile (lane-dense stores)
    h = jnp.dot(w1s_ref[...], x_ref[0],
                preferred_element_type=jnp.float32)          # conv2d11 * bn-scale  -> (24, TS)
    h = h + r_ref[0]                                         # residual add (bn bias folded into b2)
    o = jnp.dot(w2_ref[...], h,
                preferred_element_type=jnp.float32) + b2_ref[...]  # conv2d12 + folded bn bias
    o_ref[0] = o.astype(o_ref.dtype)


def fused_forward(x36, x29, w1, w2, gamma, beta, running_mean, running_var,
                  eps=BN_EPS, ts=1024):
    """x36: (N, 72, H, W) f32, x29: (N, 24, H, W) f32 -> (N, 144, H, W) f32."""
    N, _, H, W = x36.shape
    HW = H * W

    # NCHW kept as-is: pure reshape (no transpose, no pad).
    x = x36.reshape(N, C_IN, HW).astype(jnp.float32)
    r = x29.reshape(N, C_MID, HW).astype(jnp.float32)

    # Fold eval-mode BN into conv1 weight (scale) and a bias pushed through conv2.
    inv = (gamma / jnp.sqrt(running_var + eps)).astype(jnp.float32)      # (24,)
    bias_bn = (beta - running_mean * inv).astype(jnp.float32)            # (24,)

    w1m = w1.reshape(C_MID, C_IN).astype(jnp.float32)                    # (24, 72)
    w2m = w2.reshape(C_OUT, C_MID).astype(jnp.float32)                   # (144, 24)
    w1s = w1m * inv[:, None]                                             # (24, 72)
    b2 = (w2m @ bias_bn).reshape(C_OUT, 1)                               # (144, 1)

    # Spatial tile: multiple of 128 (lane width). If the full spatial extent fits in one
    # tile, use it directly (full-extent blocks are always legal). Ragged tails are
    # handled by Pallas' masked partial-block writes — no padded activation copies.
    if HW <= ts:
        ts = HW
    else:
        ts = max(128, (ts // 128) * 128)
    grid = (N, pl.cdiv(HW, ts))

    out = pl.pallas_call(
        fused_kernel,
        out_shape=jax.ShapeDtypeStruct((N, C_OUT, HW), jnp.float32),
        grid_spec=pltpu.PrefetchScalarGridSpec(
            num_scalar_prefetch=0,
            grid=grid,
            in_specs=[
                pl.BlockSpec((1, C_IN, ts), lambda n, s: (n, 0, s)),    # x tile
                pl.BlockSpec((1, C_MID, ts), lambda n, s: (n, 0, s)),   # residual tile
                pl.BlockSpec((C_MID, C_IN), lambda n, s: (0, 0)),       # w1s (resident)
                pl.BlockSpec((C_OUT, C_MID), lambda n, s: (0, 0)),      # w2  (resident)
                pl.BlockSpec((C_OUT, 1), lambda n, s: (0, 0)),          # folded bias (resident)
            ],
            out_specs=pl.BlockSpec((1, C_OUT, ts), lambda n, s: (n, 0, s)),
        ),
        compiler_params=pltpu.CompilerParams(
            dimension_semantics=("parallel", "parallel")),
    )(x, r, w1s, w2m, b2)

    return out.reshape(N, C_OUT, H, W)


def reference_forward(x36, x29, w1, w2, gamma, beta, running_mean, running_var,
                      eps=BN_EPS):
    """Plain-JAX reference of the same (eval-mode) forward, NCHW."""
    w1m = w1.reshape(C_MID, C_IN)     # (24, 72)
    w2m = w2.reshape(C_OUT, C_MID)    # (144, 24)
    x37 = jnp.einsum('nchw,oc->nohw', x36, w1m)
    inv = gamma / jnp.sqrt(running_var + eps)
    x38 = x37 * inv[None, :, None, None] + (beta - running_mean * inv)[None, :, None, None]
    x39 = x38 + x29
    x40 = jnp.einsum('nchw,oc->nohw', x39, w2m)
    return x40


if __name__ == "__main__":
    key = jax.random.PRNGKey(0)
    k = jax.random.split(key, 8)

    # Shapes matching the original module's inputs: (1, 72, 56, 56) and (1, 24, 56, 56).
    N, H, W = 1, 56, 56
    x36 = jax.random.normal(k[0], (N, C_IN, H, W), dtype=jnp.float32)
    x29 = jax.random.normal(k[1], (N, C_MID, H, W), dtype=jnp.float32)

    # Deterministic parameter init (shapes per the PyTorch module __init__).
    w1 = jax.random.normal(k[2], (C_MID, C_IN, 1, 1), dtype=jnp.float32) * 0.1   # conv2d11.weight
    w2 = jax.random.normal(k[3], (C_OUT, C_MID, 1, 1), dtype=jnp.float32) * 0.1  # conv2d12.weight
    gamma = 1.0 + 0.1 * jax.random.normal(k[4], (C_MID,), dtype=jnp.float32)     # bn.weight
    beta = 0.1 * jax.random.normal(k[5], (C_MID,), dtype=jnp.float32)            # bn.bias
    running_mean = 0.1 * jax.random.normal(k[6], (C_MID,), dtype=jnp.float32)    # bn.running_mean
    running_var = 1.0 + 0.1 * jax.random.uniform(k[7], (C_MID,), dtype=jnp.float32)  # bn.running_var

    out = fused_forward(x36, x29, w1, w2, gamma, beta, running_mean, running_var)
    out = jax.block_until_ready(out)

    ref = reference_forward(x36, x29, w1, w2, gamma, beta, running_mean, running_var)
    assert out.shape == (N, C_OUT, H, W), out.shape
    max_err = float(jnp.max(jnp.abs(out - ref)))
    assert jnp.allclose(out, ref, atol=1e-3, rtol=1e-3), max_err

    print("KERNEL_OK")
</pallas_src>

<mosaic_0001>
module attributes {stable_mosaic.version = 11 : i64} {
  func.func @fused_kernel(%arg0: i32, %arg1: i32, %arg2: memref<1x72x1024xf32, #tpu.memory_space<vmem>>, %arg3: memref<1x24x1024xf32, #tpu.memory_space<vmem>>, %arg4: memref<24x72xf32, #tpu.memory_space<vmem>>, %arg5: memref<144x24xf32, #tpu.memory_space<vmem>>, %arg6: memref<144x1xf32, #tpu.memory_space<vmem>>, %arg7: memref<1x144x1024xf32, #tpu.memory_space<vmem>>) attributes {dimension_semantics = [#tpu.dimension_semantics<parallel>, #tpu.dimension_semantics<parallel>], iteration_bounds = array<i64: 1, 4>, scalar_prefetch = 0 : i64, scratch_operands = 0 : i64, tpu.core_type = #tpu.core_type<tc>, window_params = [{transform_indices = @transform_0, window_bounds = array<i64: 1, 72, 1024>}, {transform_indices = @transform_1, window_bounds = array<i64: 1, 24, 1024>}, {pipeline_mode = #tpu.pipeline_mode<synchronous>, transform_indices = @transform_2, window_bounds = array<i64: 24, 72>}, {pipeline_mode = #tpu.pipeline_mode<synchronous>, transform_indices = @transform_3, window_bounds = array<i64: 144, 24>}, {pipeline_mode = #tpu.pipeline_mode<synchronous>, transform_indices = @transform_4, window_bounds = array<i64: 144, 1>}, {transform_indices = @transform_5, window_bounds = array<i64: 1, 144, 1024>}]} {
    %c0 = arith.constant 0 : index
    %c0_0 = arith.constant 0 : index
    %0 = vector.load %arg4[%c0, %c0_0] : memref<24x72xf32, #tpu.memory_space<vmem>>, vector<24x72xf32>
    %c0_1 = arith.constant 0 : index
    %c0_2 = arith.constant 0 : index
    %c0_3 = arith.constant 0 : index
    %1 = vector.load %arg2[%c0_1, %c0_2, %c0_3] : memref<1x72x1024xf32, #tpu.memory_space<vmem>>, vector<1x72x1024xf32>
    %2 = vector.shape_cast %1 : vector<1x72x1024xf32> to vector<72x1024xf32>
    %cst = arith.constant dense<0.000000e+00> : vector<24x1024xf32>
    %3 = tpu.matmul %0, %2, %cst {dimension_numbers = #tpu.dot_dimension_numbers<[1], [0], [0], [1], [0, 0, 1, 1], [], []>} : vector<24x72xf32>, vector<72x1024xf32>, vector<24x1024xf32> -> vector<24x1024xf32>
    %c0_4 = arith.constant 0 : index
    %c0_5 = arith.constant 0 : index
    %c0_6 = arith.constant 0 : index
    %4 = vector.load %arg3[%c0_4, %c0_5, %c0_6] : memref<1x24x1024xf32, #tpu.memory_space<vmem>>, vector<1x24x1024xf32>
    %5 = vector.shape_cast %4 : vector<1x24x1024xf32> to vector<24x1024xf32>
    %6 = arith.addf %3, %5 : vector<24x1024xf32>
    %c0_7 = arith.constant 0 : index
    %c0_8 = arith.constant 0 : index
    %7 = vector.load %arg5[%c0_7, %c0_8] : memref<144x24xf32, #tpu.memory_space<vmem>>, vector<144x24xf32>
    %cst_9 = arith.constant dense<0.000000e+00> : vector<144x1024xf32>
    %8 = tpu.matmul %7, %6, %cst_9 {dimension_numbers = #tpu.dot_dimension_numbers<[1], [0], [0], [1], [0, 0, 1, 1], [], []>} : vector<144x24xf32>, vector<24x1024xf32>, vector<144x1024xf32> -> vector<144x1024xf32>
    %c0_10 = arith.constant 0 : index
    %c0_11 = arith.constant 0 : index
    %9 = vector.load %arg6[%c0_10, %c0_11] : memref<144x1xf32, #tpu.memory_space<vmem>>, vector<144x1xf32>
    %10 = vector.broadcast %9 : vector<144x1xf32> to vector<144x1024xf32>
    %11 = arith.addf %8, %10 : vector<144x1024xf32>
    %c0_12 = arith.constant 0 : index
    %c0_13 = arith.constant 0 : index
    %c0_14 = arith.constant 0 : index
    %12 = vector.load %arg7[%c0_12, %c0_13, %c0_14] : memref<1x144x1024xf32, #tpu.memory_space<vmem>>, vector<1x144x1024xf32>
    %13 = vector.shape_cast %12 : vector<1x144x1024xf32> to vector<144x1024xf32>
    %14 = vector.shape_cast %11 : vector<144x1024xf32> to vector<1x144x1024xf32>
    tpu.vector_store %arg7[%c0_12, %c0_13, %c0_14], %14 {strides = array<i32>} : memref<1x144x1024xf32, #tpu.memory_space<vmem>>, vector<1x144x1024xf32>,
    return
  }
  func.func @transform_0(%arg0: i32, %arg1: i32) -> (i32, i32, i32) {
    %c0_i32 = arith.constant 0 : i32
    %c0_i32_0 = arith.constant 0 : i32
    return %arg0, %c0_i32, %arg1 : i32, i32, i32
  }
  func.func @transform_1(%arg0: i32, %arg1: i32) -> (i32, i32, i32) {
    %c0_i32 = arith.constant 0 : i32
    %c0_i32_0 = arith.constant 0 : i32
    return %arg0, %c0_i32, %arg1 : i32, i32, i32
  }
  func.func @transform_2(%arg0: i32, %arg1: i32) -> (i32, i32) {
    %c0_i32 = arith.constant 0 : i32
    %c0_i32_0 = arith.constant 0 : i32
    %c0_i32_1 = arith.constant 0 : i32
    return %c0_i32, %c0_i32_0 : i32, i32
  }
  func.func @transform_3(%arg0: i32, %arg1: i32) -> (i32, i32) {
    %c0_i32 = arith.constant 0 : i32
    %c0_i32_0 = arith.constant 0 : i32
    %c0_i32_1 = arith.constant 0 : i32
    return %c0_i32, %c0_i32_0 : i32, i32
  }
  func.func @transform_4(%arg0: i32, %arg1: i32) -> (i32, i32) {
    %c0_i32 = arith.constant 0 : i32
    %c0_i32_0 = arith.constant 0 : i32
    %c0_i32_1 = arith.constant 0 : i32
    return %c0_i32, %c0_i32_0 : i32, i32
  }
  func.func @transform_5(%arg0: i32, %arg1: i32) -> (i32, i32, i32) {
    %c0_i32 = arith.constant 0 : i32
    %c0_i32_0 = arith.constant 0 : i32
    return %arg0, %c0_i32, %arg1 : i32, i32, i32
  }
}

</mosaic_0001>

<llo_original>
// kernel: tpu_custom_call.1
$region0: #{tpu_custom_call.1}
  #allocation0 [shape = 'u32[]', space=smem, size = 0x4, offset = 0x4, fixed_abs, tag = 'smem constant byte address 0x4 - core index']
  #allocation1 [shape = 'u32[144,128]{1,0:T(1,128)}', space=vmem, size = 0x12000, scoped, tag = 'internal scratch']
  %s0 = inlined_call_operand.hbm [shape: f32[1,72,3136], index: 0, kind: input, shape index: {}]
  %s1 = inlined_call_operand.hbm [shape: f32[1,24,3136], index: 1, kind: input, shape index: {}]
  %s2 = inlined_call_operand.hbm [shape: f32[24,72], index: 2, kind: input, shape index: {}]
  %s3 = inlined_call_operand.vmem [shape: f32[144,24], index: 3, kind: input, shape index: {}]
  %s4 = inlined_call_operand.vmem [shape: f32[144,1], index: 4, kind: input, shape index: {}]
  %s5 = inlined_call_operand.hbm [shape: f32[1,144,3136], index: 5, kind: output, shape index: {}]
  %s6 = sld [smem:[#allocation0]]
  $region65: #{tpu_custom_call.1} parent=0
    _
  %s8 = ssub.s32 1, %s6
  %s9 = scalar_select 0, %s8, %s6
  $region1: #{tpu_custom_call.1} parent=0
    #allocation2 [shape = 'u8[589824]{0}', space=vmem, size = 0x90000, scoped, tag = 'input window, operand 0']
    #allocation3 [shape = 's32[2]{0}', space=sflag, size = 0x8, scoped, tag = 'scoped memory for tpu_custom_call.1']
    #allocation4 [shape = 's32[2]{0}', space=sflag, size = 0x8, scoped, tag = 'scoped memory for tpu_custom_call.1']
    #allocation5 [shape = 'u8[196608]{0}', space=vmem, size = 0x30000, scoped, tag = 'input window, operand 1']
    #allocation6 [shape = 's32[2]{0}', space=sflag, size = 0x8, scoped, tag = 'scoped memory for tpu_custom_call.1']
    #allocation7 [shape = 'u8[12288]{0}', space=vmem, size = 0x3000, scoped, tag = 'input window, operand 2, single buffered']
    #allocation8 [shape = 'u8[1179648]{0}', space=vmem, size = 0x120000, scoped, tag = 'output window, operand 0']
    %10 = vsyncpa [#allocation3], 0
    %s11 = scalar_lea.sflag [#allocation3], 1
    %12 = vsyncpa %s11, 0
    %13 = vsyncpa [#allocation6], 0
    %s14 = scalar_lea.sflag [#allocation6], 1
    %15 = vsyncpa %s14, 0
    %16 = vsyncpa [#allocation4], 0
    %s17 = scalar_lea.sflag [#allocation4], 1
    %18 = vsyncpa %s17, 0
    loop: start=0, step=1, limit=6
    $region2: #{tpu_custom_call.1} parent=1 // loop_pre_header
      _
    $region3: #{tpu_custom_call.1} parent=1 // loop_header
      %s20 = sphi 0, %s24
      %p21 = scmp.ge.s32.totalorder %s20, 6
      %s27 = sphi 0, %s39
      %s28 = sphi 0, %s35
      %s29 = sphi 0, %s27
      %s30 = sphi 0, %s28
      %s31 = sphi 0, %s29
      %s32 = sphi 0, %s30
      %s44 = sphi 0, %s46
      %s47 = sphi 0, %s44
      %s48 = sphi 0, %s47
      %s64 = sphi 0, %s48
      %s72 = sphi 0, %s74
      %s75 = sphi 0, %s72
      %s76 = sphi 0, %s75
      %s92 = sphi 0, %s76
      %s96 = sphi 0, %s96
      %s98 = sphi 0, %s96
      %s99 = sphi 0, %s98
      %s113 = sphi 0, %s99
      %s117 = sphi 0, %s117
      %s119 = sphi 0, %s117
      %s120 = sphi 0, %s119
      %s134 = sphi 0, %s120
      %s138 = sphi 0, %s138
      %s140 = sphi 0, %s138
      %s141 = sphi 0, %s140
      %s155 = sphi 0, %s141
      %s163 = sphi 0, %s165
      %s166 = sphi 0, %s163
      %s167 = sphi 0, %s166
      %s183 = sphi 0, %s167
    $region4: #{tpu_custom_call.1} parent=1 // loop_header_branch
      %23 = sbr.rel (%p21) target = $region8
    $region5: #{tpu_custom_call.1} parent=1 // loop_body
      %s25 = ssub.s32 %s20, 1
      %s26 = ssub.s32 %s20, 2
      %s33 = sadd.s32 1, %s28
      %p34 = scmp.ge.s32.totalorder %s33, 4
      %s35 = scalar_select %p34, 0, %s33
      %s36 = sadd.s32 1, %s27
      %s37 = scalar_select %p34, %s36, %s27
      %p38 = scmp.ge.s32.totalorder %s37, 1
      %s39 = scalar_select %p38, 0, %s37
      %s40 = ssub.s32 %s27, %s39
      %s41 = ssub.s32 %s28, %s35
      %s42 = sor.u32 %s40, %s41
      %p43 = scmp.eq.s32.totalorder %s42, 0
      %s45 = sadd.s32 %s44, 1
      %s46 = scalar_select %p43, %s44, %s45
      %p49 = pneg %p43
      %p50 = scmp.eq.s32.totalorder %s20, 3
      %p51 = por %p49, %p50
      %p52 = scmp.ne.s32.totalorder %s44, %s47
      %p53 = scmp.eq.s32.totalorder %s20, 0
      %p54 = por %p52, %p53
      %p55 = scmp.ne.s32.totalorder %s44, %s47
      %p56 = scmp.eq.s32.totalorder %s25, 3
      %p57 = por %p55, %p56
      %p58 = scmp.ne.s32.totalorder %s47, %s48
      %p59 = scmp.eq.s32.totalorder %s25, 0
      %p60 = por %p58, %p59
      %p61 = scmp.ne.s32.totalorder %s47, %s48
      %p62 = scmp.eq.s32.totalorder %s26, 3
      %p63 = por %p61, %p62
      %p65 = scmp.ne.s32.totalorder %s48, %s64
      %p66 = scmp.eq.s32.totalorder %s26, 0
      %p67 = por %p65, %p66
      %s68 = ssub.s32 %s27, %s39
      %s69 = ssub.s32 %s28, %s35
      %s70 = sor.u32 %s68, %s69
      %p71 = scmp.eq.s32.totalorder %s70, 0
      %s73 = sadd.s32 %s72, 1
      %s74 = scalar_select %p71, %s72, %s73
      %p77 = pneg %p71
      %p78 = scmp.eq.s32.totalorder %s20, 3
      %p79 = por %p77, %p78
      %p80 = scmp.ne.s32.totalorder %s72, %s75
      %p81 = scmp.eq.s32.totalorder %s20, 0
      %p82 = por %p80, %p81
      %p83 = scmp.ne.s32.totalorder %s72, %s75
      %p84 = scmp.eq.s32.totalorder %s25, 3
      %p85 = por %p83, %p84
      %p86 = scmp.ne.s32.totalorder %s75, %s76
      %p87 = scmp.eq.s32.totalorder %s25, 0
      %p88 = por %p86, %p87
      %p89 = scmp.ne.s32.totalorder %s75, %s76
      %p90 = scmp.eq.s32.totalorder %s26, 3
      %p91 = por %p89, %p90
      %p93 = scmp.ne.s32.totalorder %s76, %s92
      %p94 = scmp.eq.s32.totalorder %s26, 0
      %p95 = por %p93, %p94
      %s97 = sadd.s32 %s96, 1
      %p100 = scmp.eq.s32.totalorder %s20, 3
      %p101 = scmp.ne.s32.totalorder %s96, %s98
      %p102 = scmp.eq.s32.totalorder %s20, 0
      %p103 = por %p101, %p102
      %p104 = scmp.ne.s32.totalorder %s96, %s98
      %p105 = scmp.eq.s32.totalorder %s25, 3
      %p106 = por %p104, %p105
      %p107 = scmp.ne.s32.totalorder %s98, %s99
      %p108 = scmp.eq.s32.totalorder %s25, 0
      %p109 = por %p107, %p108
      %p110 = scmp.ne.s32.totalorder %s98, %s99
      %p111 = scmp.eq.s32.totalorder %s26, 3
      %p112 = por %p110, %p111
      %p114 = scmp.ne.s32.totalorder %s99, %s113
      %p115 = scmp.eq.s32.totalorder %s26, 0
      %p116 = por %p114, %p115
      %s118 = sadd.s32 %s117, 1
      %p121 = scmp.eq.s32.totalorder %s20, 3
      %p122 = scmp.ne.s32.totalorder %s117, %s119
      %p123 = scmp.eq.s32.totalorder %s20, 0
      %p124 = por %p122, %p123
      %p125 = scmp.ne.s32.totalorder %s117, %s119
      %p126 = scmp.eq.s32.totalorder %s25, 3
      %p127 = por %p125, %p126
      %p128 = scmp.ne.s32.totalorder %s119, %s120
      %p129 = scmp.eq.s32.totalorder %s25, 0
      %p130 = por %p128, %p129
      %p131 = scmp.ne.s32.totalorder %s119, %s120
      %p132 = scmp.eq.s32.totalorder %s26, 3
      %p133 = por %p131, %p132
      %p135 = scmp.ne.s32.totalorder %s120, %s134
      %p136 = scmp.eq.s32.totalorder %s26, 0
      %p137 = por %p135, %p136
      %s139 = sadd.s32 %s138, 1
      %p142 = scmp.eq.s32.totalorder %s20, 3
      %p143 = scmp.ne.s32.totalorder %s138, %s140
      %p144 = scmp.eq.s32.totalorder %s20, 0
      %p145 = por %p143, %p144
      %p146 = scmp.ne.s32.totalorder %s138, %s140
      %p147 = scmp.eq.s32.totalorder %s25, 3
      %p148 = por %p146, %p147
      %p149 = scmp.ne.s32.totalorder %s140, %s141
      %p150 = scmp.eq.s32.totalorder %s25, 0
      %p151 = por %p149, %p150
      %p152 = scmp.ne.s32.totalorder %s140, %s141
      %p153 = scmp.eq.s32.totalorder %s26, 3
      %p154 = por %p152, %p153
      %p156 = scmp.ne.s32.totalorder %s141, %s155
      %p157 = scmp.eq.s32.totalorder %s26, 0
      %p158 = por %p156, %p157
      %s159 = ssub.s32 %s27, %s39
      %s160 = ssub.s32 %s28, %s35
      %s161 = sor.u32 %s159, %s160
      %p162 = scmp.eq.s32.totalorder %s161, 0
      %s164 = sadd.s32 %s163, 1
      %s165 = scalar_select %p162, %s163, %s164
      %p168 = pneg %p162
      %p169 = scmp.eq.s32.totalorder %s20, 3
      %p170 = por %p168, %p169
      %p171 = scmp.ne.s32.totalorder %s163, %s166
      %p172 = scmp.eq.s32.totalorder %s20, 0
      %p173 = por %p171, %p172
      %p174 = scmp.ne.s32.totalorder %s163, %s166
      %p175 = scmp.eq.s32.totalorder %s25, 3
      %p176 = por %p174, %p175
      %p177 = scmp.ne.s32.totalorder %s166, %s167
      %p178 = scmp.eq.s32.totalorder %s25, 0
      %p179 = por %p177, %p178
      %p180 = scmp.ne.s32.totalorder %s166, %s167
      %p181 = scmp.eq.s32.totalorder %s26, 3
      %p182 = por %p180, %p181
      %p184 = scmp.ne.s32.totalorder %s167, %s183
      %p185 = scmp.eq.s32.totalorder %s26, 0
      %p186 = por %p184, %p185
      %p187 = scmp.le.s32.totalorder 1, %s20
      %p188 = scmp.lt.s32.totalorder %s20, 5
      %p189 = pnand %p187, %p188
      %p190 = pneg %p189
      // Predicated region
      $region9: #{tpu_custom_call.1} parent=5 // pred_check
        _
      $region10: #{tpu_custom_call.1} parent=5 // pred_check_branch
        %192 = sbr.rel (%p189) target = $region12
      $region11: #{tpu_custom_call.1} parent=5 // pred_region
        %s193 = ssub.s32 %s20, 1
        // Predicated region
        $region13: #{tpu_custom_call.1} parent=11 // pred_check
          %p194 = pneg %p109
        $region14: #{tpu_custom_call.1} parent=11 // pred_check_branch
          %196 = sbr.rel (%p194) target = $region16
        $region15: #{tpu_custom_call.1} parent=11 // pred_region
          %s198 = ssub.s32 384, 384
          %199 = vsyncadd [#allocation6], %s198
          %s200 = sshll.u32 [#allocation7], 4
          %s201 = int_to_ptr.vmem [resolvable:$true] %s200
          %206 = dma.hbm_to_vmem [thread:$0]  %s2, 384, %s201, [#allocation6], 128, 128, 8
        $region16: #{tpu_custom_call.1} parent=11 // pred_fallthru
          _
        // Predicated region
        $region17: #{tpu_custom_call.1} parent=11 // pred_check
          %p207 = pneg %p130
        $region18: #{tpu_custom_call.1} parent=11 // pred_check_branch
          %209 = sbr.rel (%p207) target = $region20
        $region19: #{tpu_custom_call.1} parent=11 // pred_region
          _
        $region20: #{tpu_custom_call.1} parent=11 // pred_fallthru
          _
        // Predicated region
        $region21: #{tpu_custom_call.1} parent=11 // pred_check
          %p210 = pneg %p151
        $region22: #{tpu_custom_call.1} parent=11 // pred_check_branch
          %212 = sbr.rel (%p210) target = $region24
        $region23: #{tpu_custom_call.1} parent=11 // pred_region
          _
        $region24: #{tpu_custom_call.1} parent=11 // pred_fallthru
          _
      $region12: #{tpu_custom_call.1} parent=5 // pred_fallthru
        _
      %p213 = scmp.lt.s32.totalorder %s20, 4
      // Predicated region
      $region25: #{tpu_custom_call.1} parent=5 // pred_check
        %p214 = pneg %p213
      $region26: #{tpu_custom_call.1} parent=5 // pred_check_branch
        %216 = sbr.rel (%p214) target = $region28
      $region27: #{tpu_custom_call.1} parent=5 // pred_region
        // Predicated region
        $region29: #{tpu_custom_call.1} parent=27 // pred_check
          %p217 = pneg %p54
        $region30: #{tpu_custom_call.1} parent=27 // pred_check_branch
          %219 = sbr.rel (%p217) target = $region32
        $region31: #{tpu_custom_call.1} parent=27 // pred_region
          %s220 = sand.u32 %s44, 1
          %s221 = scalar_lea.sflag [#allocation3], %s220
          %s222 = sand.u32 %s44, 1
          %s223 = smul.addr %s222, 576
          %s224 = scalar_lea.vmem [#allocation2], %s223
          %s225 = smul.u32 8, %s28
          %s226 = ssub.s32 25, %s225
          %p227 = scmp.lt.s32.totalorder %s226, 8
          %s228 = scalar_select %p227, %s226, 8
          %s229 = smul.u32 1152, %s228
          %s231 = ssub.s32 9216, %s229
          %232 = vsyncadd %s221, %s231
          %p233 = scmp.ne.s32.totalorder 0, %s229
          %s234 = smul.addr %s27, 225
          %s235 = sadd.s32 %s225, %s234
          %s236 = smul.addr %s235, 128
          %s237 = scalar_lea.hbm %s0, %s236
          %s238 = smul.u32 %s228, 8
          %s239 = smul.u32 %s238, 9
          %s240 = sshll.u32 %s224, 4
          %s241 = int_to_ptr.vmem [resolvable:$true] %s240
          %s242 = sshll.u32 %s239, 4
          %246 = dma.hbm_to_vmem [thread:$0]  (%p233), %s237, %s242, %s241, %s221, 3200, 1024, %s238
        $region32: #{tpu_custom_call.1} parent=27 // pred_fallthru
          _
        // Predicated region
        $region33: #{tpu_custom_call.1} parent=27 // pred_check
          %p247 = pneg %p82
        $region34: #{tpu_custom_call.1} parent=27 // pred_check_branch
          %249 = sbr.rel (%p247) target = $region36
        $region35: #{tpu_custom_call.1} parent=27 // pred_region
          %s250 = sand.u32 %s20, 1
          %s251 = scalar_lea.sflag [#allocation6], %s250
          %s252 = sand.u32 %s72, 1
          %s253 = smul.addr %s252, 192
          %s254 = scalar_lea.vmem [#allocation5], %s253
          %s255 = smul.u32 8, %s28
          %s256 = ssub.s32 25, %s255
          %p257 = scmp.lt.s32.totalorder %s256, 8
          %s258 = scalar_select %p257, %s256, 8
          %s259 = smul.u32 384, %s258
          %s261 = ssub.s32 3072, %s259
          %262 = vsyncadd %s251, %s261
          %p263 = scmp.ne.s32.totalorder 0, %s259
          %s264 = smul.addr %s27, 75
          %s265 = sadd.s32 %s255, %s264
          %s266 = smul.addr %s265, 128
          %s267 = scalar_lea.hbm %s1, %s266
          %s268 = smul.u32 %s258, 8
          %s269 = smul.u32 %s268, 3
          %s270 = sshll.u32 %s254, 4
          %s271 = int_to_ptr.vmem [resolvable:$true] %s270
          %s272 = sshll.u32 %s269, 4
          %276 = dma.hbm_to_vmem [thread:$0]  (%p263), %s267, %s272, %s271, %s251, 3200, 1024, %s268
        $region36: #{tpu_custom_call.1} parent=27 // pred_fallthru
          _
      $region28: #{tpu_custom_call.1} parent=5 // pred_fallthru
        _
      %p277 = scmp.le.s32.totalorder 1, %s20
      %p278 = scmp.lt.s32.totalorder %s20, 5
      %p279 = pnand %p277, %p278
      %p280 = pneg %p279
      // Predicated region
      $region37: #{tpu_custom_call.1} parent=5 // pred_check
        _
      $region38: #{tpu_custom_call.1} parent=5 // pred_check_branch
        %282 = sbr.rel (%p279) target = $region40
      $region39: #{tpu_custom_call.1} parent=5 // pred_region
        %s283 = ssub.s32 %s20, 1
        %s284 = sand.u32 %s47, 1
        %s285 = scalar_lea.sflag [#allocation3], %s284
        %s286 = sand.u32 %s47, 1
        %s287 = smul.addr %s286, 576
        %s288 = scalar_lea.vmem [#allocation2], %s287
        // Predicated region
        $region41: #{tpu_custom_call.1} parent=39 // pred_check
          %p289 = pneg %p60
        $region42: #{tpu_custom_call.1} parent=39 // pred_check_branch
          %291 = sbr.rel (%p289) target = $region44
        $region43: #{tpu_custom_call.1} parent=39 // pred_region
          %292 = dma.done %s285, 9216
        $region44: #{tpu_custom_call.1} parent=39 // pred_fallthru
          _
        %s293 = sand.u32 %s25, 1
        %s294 = scalar_lea.sflag [#allocation6], %s293
        %s295 = sand.u32 %s75, 1
        %s296 = smul.addr %s295, 192
        %s297 = scalar_lea.vmem [#allocation5], %s296
        // Predicated region
        $region45: #{tpu_custom_call.1} parent=39 // pred_check
          %p298 = pneg %p88
        $region46: #{tpu_custom_call.1} parent=39 // pred_check_branch
          %300 = sbr.rel (%p298) target = $region48
        $region47: #{tpu_custom_call.1} parent=39 // pred_region
          %301 = dma.done %s294, 3072
        $region48: #{tpu_custom_call.1} parent=39 // pred_fallthru
          _
        // Predicated region
        $region49: #{tpu_custom_call.1} parent=39 // pred_check
          %p302 = pneg %p109
        $region50: #{tpu_custom_call.1} parent=39 // pred_check_branch
          %304 = sbr.rel (%p302) target = $region52
        $region51: #{tpu_custom_call.1} parent=39 // pred_region
          %305 = dma.done [#allocation6], 384
        $region52: #{tpu_custom_call.1} parent=39 // pred_fallthru
          _
        %s306 = sand.u32 %s47, 1
        %s307 = scalar_lea.sflag [#allocation3], %s306
        %s308 = sand.u32 %s47, 1
        %s309 = smul.addr %s308, 576
        %s310 = scalar_lea.vmem [#allocation2], %s309
        %p311 = pneg %p60
        %p312 = pneg %p57
        %s313 = sand.u32 %s25, 1
        %s314 = scalar_lea.sflag [#allocation6], %s313
        %s315 = sand.u32 %s75, 1
        %s316 = smul.addr %s315, 192
        %s317 = scalar_lea.vmem [#allocation5], %s316
        %p318 = pneg %p88
        %p319 = pneg %p85
        %p320 = pneg %p109
        %p321 = pneg %p106
        %p322 = pneg %p130
        %p323 = pneg %p127
        %p324 = pneg %p151
        %p325 = pneg %p148
        %p326 = pneg %p179
        %p327 = pneg %p176
        %s328 = sand.u32 %s166, 1
        %s329 = scalar_lea.sflag [#allocation4], %s328
        %s330 = sand.u32 %s166, 1
        %s331 = smul.addr %s330, 1152
        %s332 = scalar_lea.vmem [#allocation8], %s331
        %s333 = smul.u32 8, %s30
        %s334 = ssub.s32 25, %s333
        %p335 = scmp.lt.s32.totalorder %s334, 8
        %s336 = scalar_select %p335, %s334, 8
        %s337 = smul.u32 1152, %s336
        %s338 = smul.u32 8, %s30
        %s339 = ssub.s32 25, %s338
        %p340 = scmp.lt.s32.totalorder %s339, 8
        %s341 = scalar_select %p340, %s339, 8
        %s342 = smul.u32 384, %s341
        %s343 = smul.u32 8, %s30
        %s344 = ssub.s32 25, %s343
        %p345 = scmp.lt.s32.totalorder %s344, 8
        %s346 = scalar_select %p345, %s344, 8
        %s347 = smul.u32 2304, %s346
        %v348 = vld [vmem:[#allocation7] sm:$0xff]
        %v349 = vld [vmem:[#allocation7 + $0x8] sm:$0xff]
        %v350 = vld [vmem:[#allocation7 + $0x10] sm:$0xff]
        %v351 = vld [vmem:[%s288] sm:$0xff]
        %v352 = vld [vmem:[%s288 + $0x8] sm:$0xff]
        %v353 = vld [vmem:[%s288 + $0x10] sm:$0xff]
        %v354 = vld [vmem:[%s288 + $0x18] sm:$0xff]
        %v355 = vld [vmem:[%s288 + $0x20] sm:$0xff]
        %v356 = vld [vmem:[%s288 + $0x28] sm:$0xff]
        %v357 = vld [vmem:[%s288 + $0x30] sm:$0xff]
        %v358 = vld [vmem:[%s288 + $0x38] sm:$0xff]
        %v359 = vld [vmem:[%s288 + $0x40] sm:$0xff]
        %v360 = vld [vmem:[%s288 + $0x48] sm:$0xff]
        %v361 = vld [vmem:[%s288 + $0x50] sm:$0xff]
        %v362 = vld [vmem:[%s288 + $0x58] sm:$0xff]
        %v363 = vld [vmem:[%s288 + $0x60] sm:$0xff]
        %v364 = vld [vmem:[%s288 + $0x68] sm:$0xff]
        %v365 = vld [vmem:[%s288 + $0x70] sm:$0xff]
        %v366 = vld [vmem:[%s288 + $0x78] sm:$0xff]
        %v367 = vld [vmem:[%s288 + $0x80] sm:$0xff]
        %v368 = vld [vmem:[%s288 + $0x88] sm:$0xff]
        %v369 = vld [vmem:[%s288 + $0x90] sm:$0xff]
        %v370 = vld [vmem:[%s288 + $0x98] sm:$0xff]
        %v371 = vld [vmem:[%s288 + $0xa0] sm:$0xff]
        %v372 = vld [vmem:[%s288 + $0xa8] sm:$0xff]
        %v373 = vld [vmem:[%s288 + $0xb0] sm:$0xff]
        %v374 = vld [vmem:[%s288 + $0xb8] sm:$0xff]
        %v375 = vld [vmem:[%s288 + $0xc0] sm:$0xff]
        %v376 = vld [vmem:[%s288 + $0xc8] sm:$0xff]
        %v377 = vld [vmem:[%s288 + $0xd0] sm:$0xff]
        %v378 = vld [vmem:[%s288 + $0xd8] sm:$0xff]
        %v379 = vld [vmem:[%s288 + $0xe0] sm:$0xff]
        %v380 = vld [vmem:[%s288 + $0xe8] sm:$0xff]
        %v381 = vld [vmem:[%s288 + $0xf0] sm:$0xff]
        %v382 = vld [vmem:[%s288 + $0xf8] sm:$0xff]
        %v383 = vld [vmem:[%s288 + $0x100] sm:$0xff]
        %v384 = vld [vmem:[%s288 + $0x108] sm:$0xff]
        %v385 = vld [vmem:[%s288 + $0x110] sm:$0xff]
        %v386 = vld [vmem:[%s288 + $0x118] sm:$0xff]
        %v387 = vld [vmem:[%s288 + $0x120] sm:$0xff]
        %v388 = vld [vmem:[%s288 + $0x128] sm:$0xff]
        %v389 = vld [vmem:[%s288 + $0x130] sm:$0xff]
        %v390 = vld [vmem:[%s288 + $0x138] sm:$0xff]
        %v391 = vld [vmem:[%s288 + $0x140] sm:$0xff]
        %v392 = vld [vmem:[%s288 + $0x148] sm:$0xff]
        %v393 = vld [vmem:[%s288 + $0x150] sm:$0xff]
        %v394 = vld [vmem:[%s288 + $0x158] sm:$0xff]
        %v395 = vld [vmem:[%s288 + $0x160] sm:$0xff]
        %v396 = vld [vmem:[%s288 + $0x168] sm:$0xff]
        %v397 = vld [vmem:[%s288 + $0x170] sm:$0xff]
        %v398 = vld [vmem:[%s288 + $0x178] sm:$0xff]
        %v399 = vld [vmem:[%s288 + $0x180] sm:$0xff]
        %v400 = vld [vmem:[%s288 + $0x188] sm:$0xff]
        %v401 = vld [vmem:[%s288 + $0x190] sm:$0xff]
        %v402 = vld [vmem:[%s288 + $0x198] sm:$0xff]
        %v403 = vld [vmem:[%s288 + $0x1a0] sm:$0xff]
        %v404 = vld [vmem:[%s288 + $0x1a8] sm:$0xff]
        %v405 = vld [vmem:[%s288 + $0x1b0] sm:$0xff]
        %v406 = vld [vmem:[%s288 + $0x1b8] sm:$0xff]
        %v407 = vld [vmem:[%s288 + $0x1c0] sm:$0xff]
        %v408 = vld [vmem:[%s288 + $0x1c8] sm:$0xff]
        %v409 = vld [vmem:[%s288 + $0x1d0] sm:$0xff]
        %v410 = vld [vmem:[%s288 + $0x1d8] sm:$0xff]
        %v411 = vld [vmem:[%s288 + $0x1e0] sm:$0xff]
        %v412 = vld [vmem:[%s288 + $0x1e8] sm:$0xff]
        %v413 = vld [vmem:[%s288 + $0x1f0] sm:$0xff]
        %v414 = vld [vmem:[%s288 + $0x1f8] sm:$0xff]
        %v415 = vld [vmem:[%s288 + $0x200] sm:$0xff]
        %v416 = vld [vmem:[%s288 + $0x208] sm:$0xff]
        %v417 = vld [vmem:[%s288 + $0x210] sm:$0xff]
        %v418 = vld [vmem:[%s288 + $0x218] sm:$0xff]
        %v419 = vld [vmem:[%s288 + $0x220] sm:$0xff]
        %v420 = vld [vmem:[%s288 + $0x228] sm:$0xff]
        %v421 = vld [vmem:[%s288 + $0x230] sm:$0xff]
        %v422 = vld [vmem:[%s288 + $0x238] sm:$0xff]
        %v423 = vld [vmem:[%s297] sm:$0xff]
        %v424 = vld [vmem:[%s297 + $0x8] sm:$0xff]
        %v425 = vld [vmem:[%s297 + $0x10] sm:$0xff]
        %v426 = vld [vmem:[%s297 + $0x18] sm:$0xff]
        %v427 = vld [vmem:[%s297 + $0x20] sm:$0xff]
        %v428 = vld [vmem:[%s297 + $0x28] sm:$0xff]
        %v429 = vld [vmem:[%s297 + $0x30] sm:$0xff]
        %v430 = vld [vmem:[%s297 + $0x38] sm:$0xff]
        %v431 = vld [vmem:[%s297 + $0x40] sm:$0xff]
        %v432 = vld [vmem:[%s297 + $0x48] sm:$0xff]
        %v433 = vld [vmem:[%s297 + $0x50] sm:$0xff]
        %v434 = vld [vmem:[%s297 + $0x58] sm:$0xff]
        %v435 = vld [vmem:[%s297 + $0x60] sm:$0xff]
        %v436 = vld [vmem:[%s297 + $0x68] sm:$0xff]
        %v437 = vld [vmem:[%s297 + $0x70] sm:$0xff]
        %v438 = vld [vmem:[%s297 + $0x78] sm:$0xff]
        %v439 = vld [vmem:[%s297 + $0x80] sm:$0xff]
        %v440 = vld [vmem:[%s297 + $0x88] sm:$0xff]
        %v441 = vld [vmem:[%s297 + $0x90] sm:$0xff]
        %v442 = vld [vmem:[%s297 + $0x98] sm:$0xff]
        %v443 = vld [vmem:[%s297 + $0xa0] sm:$0xff]
        %v444 = vld [vmem:[%s297 + $0xa8] sm:$0xff]
        %v445 = vld [vmem:[%s297 + $0xb0] sm:$0xff]
        %v446 = vld [vmem:[%s297 + $0xb8] sm:$0xff]
        %vm447 = vcmask 588800
        %v449 = vsel %vm447, %v348, 0
        %v452 = vsel %vm447, %v349, 0
        %v455 = vsel %vm447, %v350, 0
        %457 = vmatprep.subr.mxu0 %v352
        %458 = vmatpush1.msra.mxu0 %v351
        %459 = vmatprep.subr.mxu0 %v360
        %460 = vmatpush1.msra.mxu0 %v359
        %461 = vmatprep.subr.mxu0 %v368
        %462 = vmatpush1.msra.mxu0 %v367
        %463 = vmatprep.subr.mxu0 %v376
        %464 = vmatpush1.msra.mxu0 %v375
        %465 = vmatprep.subr.mxu0 %v384
        %466 = vmatpush1.msra.mxu0 %v383
        %467 = vmatprep.subr.mxu0 %v392
        %468 = vmatpush1.msra.mxu0 %v391
        %469 = vmatprep.subr.mxu0 %v400
        %470 = vmatpush1.msra.mxu0 %v399
        %471 = vmatprep.subr.mxu0 %v408
        %472 = vmatpush1.msra.mxu0 %v407
        %473 = vmatprep.subr.mxu0 %v416
        %474 = vmatpush1.msra.mxu0 %v415
        %475 = vmatprep.subr.mxu0 0.0
        %476 = vmatpush1.msra.mxu0 0.0
        %477 = vmatprep.subr.mxu0 0.0
        %478 = vmatpush1.msra.mxu0 0.0
        %479 = vmatprep.subr.mxu0 0.0
        %480 = vmatpush1.msra.mxu0 0.0
        %481 = vmatprep.subr.mxu0 0.0
        %482 = vmatpush1.msra.mxu0 0.0
        %483 = vmatprep.subr.mxu0 0.0
        %484 = vmatpush1.msra.mxu0 0.0
        %485 = vmatprep.subr.mxu0 0.0
        %486 = vmatpush1.msra.mxu0 0.0
        %487 = vmatprep.subr.mxu0 0.0
        %488 = vmatpush1.msra.mxu0 0.0
        %489 = vmatprep.subr.mxu0 0.0
        %490 = vmatpush1.msra.mxu0 0.0
        %491 = vmatprep.subr.mxu0 0.0
        %492 = vmatpush1.msra.mxu0 0.0
        %493 = vmatprep.subr.mxu0 0.0
        %494 = vmatpush1.msra.mxu0 0.0
        %495 = vmatprep.subr.mxu0 0.0
        %496 = vmatpush1.msra.mxu0 0.0
        %497 = vmatprep.subr.mxu0 0.0
        %498 = vmatpush1.msra.mxu0 0.0
        %499 = vmatprep.subr.mxu0 0.0
        %500 = vmatpush1.msra.mxu0 0.0
        %501 = vmatprep.subr.mxu0 0.0
        %502 = vmatpush1.msra.mxu0 0.0
        %503 = vmatprep.subr.mxu0 0.0
        %504 = vmatpush1.msra.mxu0 0.0
        %505 = vmatprep.subr.mxu0 0.0
        %506 = vmatpush1.msra.mxu0 0.0
        %507 = vmatprep.subr.mxu0 0.0
        %508 = vmatpush1.msra.mxu0 0.0
        %509 = vmatprep.subr.mxu0 0.0
        %510 = vmatpush1.msra.mxu0 0.0
        %511 = vmatprep.subr.mxu0 0.0
        %512 = vmatpush1.msra.mxu0 0.0
        %513 = vmatprep.subr.mxu0 0.0
        %514 = vmatpush1.msra.mxu0 0.0
        %515 = vmatprep.subr.mxu0 0.0
        %516 = vmatpush1.msra.mxu0 0.0
        %517 = vmatprep.subr.mxu0 0.0
        %518 = vmatpush1.msra.mxu0 0.0
        %519 = vmatprep.subr.mxu0 0.0
        %520 = vmatpush1.msra.mxu0 0.0
        %521 = vmatprep.mubr.f32.mxu0 0.0
        %522 = vmatmul.mubr.f32.gmra.mrb[0].mxu0 %v449
        %v523 = vpop.f32.mrb[0].mxu0
        %v524 = vadd.f32 %v423, %v523
        %v525 = vpop.f32.mrb[0].mxu0
        %v526 = vadd.f32 %v424, %v525
        %527 = vmatprep.mubr.f32.mxu0 0.0
        %528 = vmatmul.mubr.f32.gmra.mrb[0].mxu0 %v452
        %v529 = vpop.f32.mrb[0].mxu0
        %v530 = vadd.f32 %v431, %v529
        %v531 = vpop.f32.mrb[0].mxu0
        %v532 = vadd.f32 %v432, %v531
        %533 = vmatprep.mubr.f32.mxu0 0.0
        %534 = vmatmul.mubr.f32.gmra.mrb[0].mxu0 %v455
        %v535 = vpop.f32.mrb[0].mxu0
        %v536 = vadd.f32 %v439, %v535
        %v537 = vpop.f32.mrb[0].mxu0
        %v538 = vadd.f32 %v440, %v537
        %539 = vdwg.mxu0
        %540 = vmatprep.subr.mxu0 %v354
        %541 = vmatpush1.msra.mxu0 %v353
        %542 = vmatprep.subr.mxu0 %v362
        %543 = vmatpush1.msra.mxu0 %v361
        %544 = vmatprep.subr.mxu0 %v370
        %545 = vmatpush1.msra.mxu0 %v369
        %546 = vmatprep.subr.mxu0 %v378
        %547 = vmatpush1.msra.mxu0 %v377
        %548 = vmatprep.subr.mxu0 %v386
        %549 = vmatpush1.msra.mxu0 %v385
        %550 = vmatprep.subr.mxu0 %v394
        %551 = vmatpush1.msra.mxu0 %v393
        %552 = vmatprep.subr.mxu0 %v402
        %553 = vmatpush1.msra.mxu0 %v401
        %554 = vmatprep.subr.mxu0 %v410
        %555 = vmatpush1.msra.mxu0 %v409
        %556 = vmatprep.subr.mxu0 %v418
        %557 = vmatpush1.msra.mxu0 %v417
        %558 = vmatprep.subr.mxu0 0.0
        %559 = vmatpush1.msra.mxu0 0.0
        %560 = vmatprep.subr.mxu0 0.0
        %561 = vmatpush1.msra.mxu0 0.0
        %562 = vmatprep.subr.mxu0 0.0
        %563 = vmatpush1.msra.mxu0 0.0
        %564 = vmatprep.subr.mxu0 0.0
        %565 = vmatpush1.msra.mxu0 0.0
        %566 = vmatprep.subr.mxu0 0.0
        %567 = vmatpush1.msra.mxu0 0.0
        %568 = vmatprep.subr.mxu0 0.0
        %569 = vmatpush1.msra.mxu0 0.0
        %570 = vmatprep.subr.mxu0 0.0
        %571 = vmatpush1.msra.mxu0 0.0
        %572 = vmatprep.subr.mxu0 0.0
        %573 = vmatpush1.msra.mxu0 0.0
        %574 = vmatprep.subr.mxu0 0.0
        %575 = vmatpush1.msra.mxu0 0.0
        %576 = vmatprep.subr.mxu0 0.0
        %577 = vmatpush1.msra.mxu0 0.0
        %578 = vmatprep.subr.mxu0 0.0
        %579 = vmatpush1.msra.mxu0 0.0
        %580 = vmatprep.subr.mxu0 0.0
        %581 = vmatpush1.msra.mxu0 0.0
        %582 = vmatprep.subr.mxu0 0.0
        %583 = vmatpush1.msra.mxu0 0.0
        %584 = vmatprep.subr.mxu0 0.0
        %585 = vmatpush1.msra.mxu0 0.0
        %586 = vmatprep.subr.mxu0 0.0
        %587 = vmatpush1.msra.mxu0 0.0
        %588 = vmatprep.subr.mxu0 0.0
        %589 = vmatpush1.msra.mxu0 0.0
        %590 = vmatprep.subr.mxu0 0.0
        %591 = vmatpush1.msra.mxu0 0.0
        %592 = vmatprep.subr.mxu0 0.0
        %593 = vmatpush1.msra.mxu0 0.0
        %594 = vmatprep.subr.mxu0 0.0
        %595 = vmatpush1.msra.mxu0 0.0
        %596 = vmatprep.subr.mxu0 0.0
        %597 = vmatpush1.msra.mxu0 0.0
        %598 = vmatprep.subr.mxu0 0.0
        %599 = vmatpush1.msra.mxu0 0.0
        %600 = vmatprep.subr.mxu0 0.0
        %601 = vmatpush1.msra.mxu0 0.0
        %602 = vmatprep.subr.mxu0 0.0
        %603 = vmatpush1.msra.mxu0 0.0
        %604 = vmatprep.mubr.f32.mxu0 0.0
        %605 = vmatmul.mubr.f32.gmra.mrb[0].mxu0 %v449
        %v606 = vpop.f32.mrb[0].mxu0
        %v607 = vadd.f32 %v425, %v606
        %v608 = vpop.f32.mrb[0].mxu0
        %v609 = vadd.f32 %v426, %v608
        %610 = vmatprep.mubr.f32.mxu0 0.0
        %611 = vmatmul.mubr.f32.gmra.mrb[0].mxu0 %v452
        %v612 = vpop.f32.mrb[0].mxu0
        %v613 = vadd.f32 %v433, %v612
        %v614 = vpop.f32.mrb[0].mxu0
        %v615 = vadd.f32 %v434, %v614
        %616 = vmatprep.mubr.f32.mxu0 0.0
        %617 = vmatmul.mubr.f32.gmra.mrb[0].mxu0 %v455
        %v618 = vpop.f32.mrb[0].mxu0
        %v619 = vadd.f32 %v441, %v618
        %v620 = vpop.f32.mrb[0].mxu0
        %v621 = vadd.f32 %v442, %v620
        %622 = vdwg.mxu0
        %623 = vmatprep.subr.mxu0 %v356
        %624 = vmatpush1.msra.mxu0 %v355
        %625 = vmatprep.subr.mxu0 %v364
        %626 = vmatpush1.msra.mxu0 %v363
        %627 = vmatprep.subr.mxu0 %v372
        %628 = vmatpush1.msra.mxu0 %v371
        %629 = vmatprep.subr.mxu0 %v380
        %630 = vmatpush1.msra.mxu0 %v379
        %631 = vmatprep.subr.mxu0 %v388
        %632 = vmatpush1.msra.mxu0 %v387
        %633 = vmatprep.subr.mxu0 %v396
        %634 = vmatpush1.msra.mxu0 %v395
        %635 = vmatprep.subr.mxu0 %v404
        %636 = vmatpush1.msra.mxu0 %v403
        %637 = vmatprep.subr.mxu0 %v412
        %638 = vmatpush1.msra.mxu0 %v411
        %639 = vmatprep.subr.mxu0 %v420
        %640 = vmatpush1.msra.mxu0 %v419
        %641 = vmatprep.subr.mxu0 0.0
        %642 = vmatpush1.msra.mxu0 0.0
        %643 = vmatprep.subr.mxu0 0.0
        %644 = vmatpush1.msra.mxu0 0.0
        %645 = vmatprep.subr.mxu0 0.0
        %646 = vmatpush1.msra.mxu0 0.0
        %647 = vmatprep.subr.mxu0 0.0
        %648 = vmatpush1.msra.mxu0 0.0
        %649 = vmatprep.subr.mxu0 0.0
        %650 = vmatpush1.msra.mxu0 0.0
        %651 = vmatprep.subr.mxu0 0.0
        %652 = vmatpush1.msra.mxu0 0.0
        %653 = vmatprep.subr.mxu0 0.0
        %654 = vmatpush1.msra.mxu0 0.0
        %655 = vmatprep.subr.mxu0 0.0
        %656 = vmatpush1.msra.mxu0 0.0
        %657 = vmatprep.subr.mxu0 0.0
        %658 = vmatpush1.msra.mxu0 0.0
        %659 = vmatprep.subr.mxu0 0.0
        %660 = vmatpush1.msra.mxu0 0.0
        %661 = vmatprep.subr.mxu0 0.0
        %662 = vmatpush1.msra.mxu0 0.0
        %663 = vmatprep.subr.mxu0 0.0
        %664 = vmatpush1.msra.mxu0 0.0
        %665 = vmatprep.subr.mxu0 0.0
        %666 = vmatpush1.msra.mxu0 0.0
        %667 = vmatprep.subr.mxu0 0.0
        %668 = vmatpush1.msra.mxu0 0.0
        %669 = vmatprep.subr.mxu0 0.0
        %670 = vmatpush1.msra.mxu0 0.0
        %671 = vmatprep.subr.mxu0 0.0
        %672 = vmatpush1.msra.mxu0 0.0
        %673 = vmatprep.subr.mxu0 0.0
        %674 = vmatpush1.msra.mxu0 0.0
        %675 = vmatprep.subr.mxu0 0.0
        %676 = vmatpush1.msra.mxu0 0.0
        %677 = vmatprep.subr.mxu0 0.0
        %678 = vmatpush1.msra.mxu0 0.0
        %679 = vmatprep.subr.mxu0 0.0
        %680 = vmatpush1.msra.mxu0 0.0
        %681 = vmatprep.subr.mxu0 0.0
        %682 = vmatpush1.msra.mxu0 0.0
        %683 = vmatprep.subr.mxu0 0.0
        %684 = vmatpush1.msra.mxu0 0.0
        %685 = vmatprep.subr.mxu0 0.0
        %686 = vmatpush1.msra.mxu0 0.0
        %687 = vmatprep.mubr.f32.mxu0 0.0
        %688 = vmatmul.mubr.f32.gmra.mrb[0].mxu0 %v449
        %v689 = vpop.f32.mrb[0].mxu0
        %v690 = vadd.f32 %v427, %v689
        %v691 = vpop.f32.mrb[0].mxu0
        %v692 = vadd.f32 %v428, %v691
        %693 = vmatprep.mubr.f32.mxu0 0.0
        %694 = vmatmul.mubr.f32.gmra.mrb[0].mxu0 %v452
        %v695 = vpop.f32.mrb[0].mxu0
        %v696 = vadd.f32 %v435, %v695
        %v697 = vpop.f32.mrb[0].mxu0
        %v698 = vadd.f32 %v436, %v697
        %699 = vmatprep.mubr.f32.mxu0 0.0
        %700 = vmatmul.mubr.f32.gmra.mrb[0].mxu0 %v455
        %v701 = vpop.f32.mrb[0].mxu0
        %v702 = vadd.f32 %v443, %v701
        %v703 = vpop.f32.mrb[0].mxu0
        %v704 = vadd.f32 %v444, %v703
        %705 = vdwg.mxu0
        %706 = vmatprep.subr.mxu0 %v358
        %707 = vmatpush1.msra.mxu0 %v357
        %708 = vmatprep.subr.mxu0 %v366
        %709 = vmatpush1.msra.mxu0 %v365
        %710 = vmatprep.subr.mxu0 %v374
        %711 = vmatpush1.msra.mxu0 %v373
        %712 = vmatprep.subr.mxu0 %v382
        %713 = vmatpush1.msra.mxu0 %v381
        %714 = vmatprep.subr.mxu0 %v390
        %715 = vmatpush1.msra.mxu0 %v389
        %716 = vmatprep.subr.mxu0 %v398
        %717 = vmatpush1.msra.mxu0 %v397
        %718 = vmatprep.subr.mxu0 %v406
        %719 = vmatpush1.msra.mxu0 %v405
        %720 = vmatprep.subr.mxu0 %v414
        %721 = vmatpush1.msra.mxu0 %v413
        %722 = vmatprep.subr.mxu0 %v422
        %723 = vmatpush1.msra.mxu0 %v421
        %724 = vmatprep.subr.mxu0 0.0
        %725 = vmatpush1.msra.mxu0 0.0
        %726 = vmatprep.subr.mxu0 0.0
        %727 = vmatpush1.msra.mxu0 0.0
        %728 = vmatprep.subr.mxu0 0.0
        %729 = vmatpush1.msra.mxu0 0.0
        %730 = vmatprep.subr.mxu0 0.0
        %731 = vmatpush1.msra.mxu0 0.0
        %732 = vmatprep.subr.mxu0 0.0
        %733 = vmatpush1.msra.mxu0 0.0
        %734 = vmatprep.subr.mxu0 0.0
        %735 = vmatpush1.msra.mxu0 0.0
        %736 = vmatprep.subr.mxu0 0.0
        %737 = vmatpush1.msra.mxu0 0.0
        %738 = vmatprep.subr.mxu0 0.0
        %739 = vmatpush1.msra.mxu0 0.0
        %740 = vmatprep.subr.mxu0 0.0
        %741 = vmatpush1.msra.mxu0 0.0
        %742 = vmatprep.subr.mxu0 0.0
        %743 = vmatpush1.msra.mxu0 0.0
        %744 = vmatprep.subr.mxu0 0.0
        %745 = vmatpush1.msra.mxu0 0.0
        %746 = vmatprep.subr.mxu0 0.0
        %747 = vmatpush1.msra.mxu0 0.0
        %748 = vmatprep.subr.mxu0 0.0
        %749 = vmatpush1.msra.mxu0 0.0
        %750 = vmatprep.subr.mxu0 0.0
        %751 = vmatpush1.msra.mxu0 0.0
        %752 = vmatprep.subr.mxu0 0.0
        %753 = vmatpush1.msra.mxu0 0.0
        %754 = vmatprep.subr.mxu0 0.0
        %755 = vmatpush1.msra.mxu0 0.0
        %756 = vmatprep.subr.mxu0 0.0
        %757 = vmatpush1.msra.mxu0 0.0
        %758 = vmatprep.subr.mxu0 0.0
        %759 = vmatpush1.msra.mxu0 0.0
        %760 = vmatprep.subr.mxu0 0.0
        %761 = vmatpush1.msra.mxu0 0.0
        %762 = vmatprep.subr.mxu0 0.0
        %763 = vmatpush1.msra.mxu0 0.0
        %764 = vmatprep.subr.mxu0 0.0
        %765 = vmatpush1.msra.mxu0 0.0
        %766 = vmatprep.subr.mxu0 0.0
        %767 = vmatpush1.msra.mxu0 0.0
        %768 = vmatprep.subr.mxu0 0.0
        %769 = vmatpush1.msra.mxu0 0.0
        %770 = vmatprep.mubr.f32.mxu0 0.0
        %771 = vmatmul.mubr.f32.gmra.mrb[0].mxu0 %v449
        %v772 = vpop.f32.mrb[0].mxu0
        %v773 = vadd.f32 %v429, %v772
        %v774 = vpop.f32.mrb[0].mxu0
        %v775 = vadd.f32 %v430, %v774
        %776 = vmatprep.mubr.f32.mxu0 0.0
        %777 = vmatmul.mubr.f32.gmra.mrb[0].mxu0 %v452
        %v778 = vpop.f32.mrb[0].mxu0
        %v779 = vadd.f32 %v437, %v778
        %v780 = vpop.f32.mrb[0].mxu0
        %v781 = vadd.f32 %v438, %v780
        %782 = vmatprep.mubr.f32.mxu0 0.0
        %783 = vmatmul.mubr.f32.gmra.mrb[0].mxu0 %v455
        %v784 = vpop.f32.mrb[0].mxu0
        %v785 = vadd.f32 %v445, %v784
        %v786 = vpop.f32.mrb[0].mxu0
        %v787 = vadd.f32 %v446, %v786
        %788 = vdwg.mxu0
        %v789 = vld [vmem:[%s3] sm:$0xff]
        %v790 = vld [vmem:[%s3 + $0x8] sm:$0xff]
        %v791 = vld [vmem:[%s3 + $0x10] sm:$0xff]
        %v792 = vld [vmem:[%s3 + $0x18] sm:$0xff]
        %v793 = vld [vmem:[%s3 + $0x20] sm:$0xff]
        %v794 = vld [vmem:[%s3 + $0x28] sm:$0xff]
        %v795 = vld [vmem:[%s3 + $0x30] sm:$0xff]
        %v796 = vld [vmem:[%s3 + $0x38] sm:$0xff]
        %v797 = vld [vmem:[%s3 + $0x40] sm:$0xff]
        %v798 = vld [vmem:[%s3 + $0x48] sm:$0xff]
        %v799 = vld [vmem:[%s3 + $0x50] sm:$0xff]
        %v800 = vld [vmem:[%s3 + $0x58] sm:$0xff]
        %v801 = vld [vmem:[%s3 + $0x60] sm:$0xff]
        %v802 = vld [vmem:[%s3 + $0x68] sm:$0xff]
        %v803 = vld [vmem:[%s3 + $0x70] sm:$0xff]
        %v804 = vld [vmem:[%s3 + $0x78] sm:$0xff]
        %v805 = vld [vmem:[%s3 + $0x80] sm:$0xff]
        %v806 = vld [vmem:[%s3 + $0x88] sm:$0xff]
        %v807 = vld [vmem:[%s4] sm:$0xff]
        %v808 = vld [vmem:[%s4 + $0x8] sm:$0xff]
        %v809 = vld [vmem:[%s4 + $0x10] sm:$0xff]
        %v810 = vld [vmem:[%s4 + $0x18] sm:$0xff]
        %v811 = vld [vmem:[%s4 + $0x20] sm:$0xff]
        %v812 = vld [vmem:[%s4 + $0x28] sm:$0xff]
        %v813 = vld [vmem:[%s4 + $0x30] sm:$0xff]
        %v814 = vld [vmem:[%s4 + $0x38] sm:$0xff]
        %v815 = vld [vmem:[%s4 + $0x40] sm:$0xff]
        %v816 = vld [vmem:[%s4 + $0x48] sm:$0xff]
        %v817 = vld [vmem:[%s4 + $0x50] sm:$0xff]
        %v818 = vld [vmem:[%s4 + $0x58] sm:$0xff]
        %v819 = vld [vmem:[%s4 + $0x60] sm:$0xff]
        %v820 = vld [vmem:[%s4 + $0x68] sm:$0xff]
        %v821 = vld [vmem:[%s4 + $0x70] sm:$0xff]
        %v822 = vld [vmem:[%s4 + $0x78] sm:$0xff]
        %v823 = vld [vmem:[%s4 + $0x80] sm:$0xff]
        %v824 = vld [vmem:[%s4 + $0x88] sm:$0xff]
        %826 = vset.pattern.permute.xlu0 0
        %827 = vperm.xlu0 %826, %v807
        %v828 = vpop.permute.xlu0 %827
        %831 = vset.pattern.permute.xlu0 0
        %832 = vperm.xlu0 %831, %v808
        %v833 = vpop.permute.xlu0 %832
        %836 = vset.pattern.permute.xlu0 0
        %837 = vperm.xlu0 %836, %v809
        %v838 = vpop.permute.xlu0 %837
        %841 = vset.pattern.permute.xlu0 0
        %842 = vperm.xlu0 %841, %v810
        %v843 = vpop.permute.xlu0 %842
        %846 = vset.pattern.permute.xlu0 0
        %847 = vperm.xlu0 %846, %v811
        %v848 = vpop.permute.xlu0 %847
        %851 = vset.pattern.permute.xlu0 0
        %852 = vperm.xlu0 %851, %v812
        %v853 = vpop.permute.xlu0 %852
        %856 = vset.pattern.permute.xlu0 0
        %857 = vperm.xlu0 %856, %v813
        %v858 = vpop.permute.xlu0 %857
        %861 = vset.pattern.permute.xlu0 0
        %862 = vperm.xlu0 %861, %v814
        %v863 = vpop.permute.xlu0 %862
        %866 = vset.pattern.permute.xlu0 0
        %867 = vperm.xlu0 %866, %v815
        %v868 = vpop.permute.xlu0 %867
        %871 = vset.pattern.permute.xlu0 0
        %872 = vperm.xlu0 %871, %v816
        %v873 = vpop.permute.xlu0 %872
        %876 = vset.pattern.permute.xlu0 0
        %877 = vperm.xlu0 %876, %v817
        %v878 = vpop.permute.xlu0 %877
        %881 = vset.pattern.permute.xlu0 0
        %882 = vperm.xlu0 %881, %v818
        %v883 = vpop.permute.xlu0 %882
        %886 = vset.pattern.permute.xlu0 0
        %887 = vperm.xlu0 %886, %v819
        %v888 = vpop.permute.xlu0 %887
        %891 = vset.pattern.permute.xlu0 0
        %892 = vperm.xlu0 %891, %v820
        %v893 = vpop.permute.xlu0 %892
        %896 = vset.pattern.permute.xlu0 0
        %897 = vperm.xlu0 %896, %v821
        %v898 = vpop.permute.xlu0 %897
        %901 = vset.pattern.permute.xlu0 0
        %902 = vperm.xlu0 %901, %v822
        %v903 = vpop.permute.xlu0 %902
        %906 = vset.pattern.permute.xlu0 0
        %907 = vperm.xlu0 %906, %v823
        %v908 = vpop.permute.xlu0 %907
        %911 = vset.pattern.permute.xlu0 0
        %912 = vperm.xlu0 %911, %v824
        %v913 = vpop.permute.xlu0 %912
        %vm915 = vcmask 195584
        %v917 = vsel %vm915, %v789, 0
        %v920 = vsel %vm915, %v790, 0
        %v923 = vsel %vm915, %v791, 0
        %v926 = vsel %vm915, %v792, 0
        %v929 = vsel %vm915, %v793, 0
        %v932 = vsel %vm915, %v794, 0
        %v935 = vsel %vm915, %v795, 0
        %v938 = vsel %vm915, %v796, 0
        %v941 = vsel %vm915, %v797, 0
        %v944 = vsel %vm915, %v798, 0
        %v947 = vsel %vm915, %v799, 0
        %v950 = vsel %vm915, %v800, 0
        %v953 = vsel %vm915, %v801, 0
        %v956 = vsel %vm915, %v802, 0
        %v959 = vsel %vm915, %v803, 0
        %v962 = vsel %vm915, %v804, 0
        %v965 = vsel %vm915, %v805, 0
        %v968 = vsel %vm915, %v806, 0
        %970 = vmatprep.subr.mxu0 %v526
        %971 = vmatpush1.msra.mxu0 %v524
        %972 = vmatprep.subr.mxu0 %v532
        %973 = vmatpush1.msra.mxu0 %v530
        %974 = vmatprep.subr.mxu0 %v538
        %975 = vmatpush1.msra.mxu0 %v536
        %976 = vmatprep.subr.mxu0 0.0
        %977 = vmatpush1.msra.mxu0 0.0
        %978 = vmatprep.subr.mxu0 0.0
        %979 = vmatpush1.msra.mxu0 0.0
        %980 = vmatprep.subr.mxu0 0.0
        %981 = vmatpush1.msra.mxu0 0.0
        %982 = vmatprep.subr.mxu0 0.0
        %983 = vmatpush1.msra.mxu0 0.0
        %984 = vmatprep.subr.mxu0 0.0
        %985 = vmatpush1.msra.mxu0 0.0
        %986 = vmatprep.subr.mxu0 0.0
        %987 = vmatpush1.msra.mxu0 0.0
        %988 = vmatprep.subr.mxu0 0.0
        %989 = vmatpush1.msra.mxu0 0.0
        %990 = vmatprep.subr.mxu0 0.0
        %991 = vmatpush1.msra.mxu0 0.0
        %992 = vmatprep.subr.mxu0 0.0
        %993 = vmatpush1.msra.mxu0 0.0
        %994 = vmatprep.subr.mxu0 0.0
        %995 = vmatpush1.msra.mxu0 0.0
        %996 = vmatprep.subr.mxu0 0.0
        %997 = vmatpush1.msra.mxu0 0.0
        %998 = vmatprep.subr.mxu0 0.0
        %999 = vmatpush1.msra.mxu0 0.0
        %1000 = vmatprep.subr.mxu0 0.0
        %1001 = vmatpush1.msra.mxu0 0.0
        %1002 = vmatprep.subr.mxu0 0.0
        %1003 = vmatpush1.msra.mxu0 0.0
        %1004 = vmatprep.subr.mxu0 0.0
        %1005 = vmatpush1.msra.mxu0 0.0
        %1006 = vmatprep.subr.mxu0 0.0
        %1007 = vmatpush1.msra.mxu0 0.0
        %1008 = vmatprep.subr.mxu0 0.0
        %1009 = vmatpush1.msra.mxu0 0.0
        %1010 = vmatprep.subr.mxu0 0.0
        %1011 = vmatpush1.msra.mxu0 0.0
        %1012 = vmatprep.subr.mxu0 0.0
        %1013 = vmatpush1.msra.mxu0 0.0
        %1014 = vmatprep.subr.mxu0 0.0
        %1015 = vmatpush1.msra.mxu0 0.0
        %1016 = vmatprep.subr.mxu0 0.0
        %1017 = vmatpush1.msra.mxu0 0.0
        %1018 = vmatprep.subr.mxu0 0.0
        %1019 = vmatpush1.msra.mxu0 0.0
        %1020 = vmatprep.subr.mxu0 0.0
        %1021 = vmatpush1.msra.mxu0 0.0
        %1022 = vmatprep.subr.mxu0 0.0
        %1023 = vmatpush1.msra.mxu0 0.0
        %1024 = vmatprep.subr.mxu0 0.0
        %1025 = vmatpush1.msra.mxu0 0.0
        %1026 = vmatprep.subr.mxu0 0.0
        %1027 = vmatpush1.msra.mxu0 0.0
        %1028 = vmatprep.subr.mxu0 0.0
        %1029 = vmatpush1.msra.mxu0 0.0
        %1030 = vmatprep.subr.mxu0 0.0
        %1031 = vmatpush1.msra.mxu0 0.0
        %1032 = vmatprep.subr.mxu0 0.0
        %1033 = vmatpush1.msra.mxu0 0.0
        %1034 = vmatprep.mubr.f32.mxu0 0.0
        %1035 = vmatmul.mubr.f32.gmra.mrb[0].mxu0 %v917
        %v1036 = vpop.f32.mrb[0].mxu0
        %v1037 = vadd.f32 %v828, %v1036
        %v1038 = vpop.f32.mrb[0].mxu0
        %v1039 = vadd.f32 %v828, %v1038
        %1040 = vmatprep.mubr.f32.mxu0 0.0
        %1041 = vmatmul.mubr.f32.gmra.mrb[0].mxu0 %v920
        %v1042 = vpop.f32.mrb[0].mxu0
        %v1043 = vadd.f32 %v833, %v1042
        %v1044 = vpop.f32.mrb[0].mxu0
        %v1045 = vadd.f32 %v833, %v1044
        %1046 = vmatprep.mubr.f32.mxu0 0.0
        %1047 = vmatmul.mubr.f32.gmra.mrb[0].mxu0 %v923
        %v1048 = vpop.f32.mrb[0].mxu0
        %v1049 = vadd.f32 %v838, %v1048
        %v1050 = vpop.f32.mrb[0].mxu0
        %v1051 = vadd.f32 %v838, %v1050
        %1052 = vmatprep.mubr.f32.mxu0 0.0
        %1053 = vmatmul.mubr.f32.gmra.mrb[0].mxu0 %v926
        %v1054 = vpop.f32.mrb[0].mxu0
        %v1055 = vadd.f32 %v843, %v1054
        %v1056 = vpop.f32.mrb[0].mxu0
        %v1057 = vadd.f32 %v843, %v1056
        %1058 = vmatprep.mubr.f32.mxu0 0.0
        %1059 = vmatmul.mubr.f32.gmra.mrb[0].mxu0 %v929
        %v1060 = vpop.f32.mrb[0].mxu0
        %v1061 = vadd.f32 %v848, %v1060
        %v1062 = vpop.f32.mrb[0].mxu0
        %v1063 = vadd.f32 %v848, %v1062
        %1064 = vmatprep.mubr.f32.mxu0 0.0
        %1065 = vmatmul.mubr.f32.gmra.mrb[0].mxu0 %v932
        %v1066 = vpop.f32.mrb[0].mxu0
        %v1067 = vadd.f32 %v853, %v1066
        %v1068 = vpop.f32.mrb[0].mxu0
        %v1069 = vadd.f32 %v853, %v1068
        %1070 = vmatprep.mubr.f32.mxu0 0.0
        %1071 = vmatmul.mubr.f32.gmra.mrb[0].mxu0 %v935
        %v1072 = vpop.f32.mrb[0].mxu0
        %v1073 = vadd.f32 %v858, %v1072
        %v1074 = vpop.f32.mrb[0].mxu0
        %v1075 = vadd.f32 %v858, %v1074
        %1076 = vmatprep.mubr.f32.mxu0 0.0
        %1077 = vmatmul.mubr.f32.gmra.mrb[0].mxu0 %v938
        %v1078 = vpop.f32.mrb[0].mxu0
        %v1079 = vadd.f32 %v863, %v1078
        %v1080 = vpop.f32.mrb[0].mxu0
        %v1081 = vadd.f32 %v863, %v1080
        %1082 = vmatprep.mubr.f32.mxu0 0.0
        %1083 = vmatmul.mubr.f32.gmra.mrb[0].mxu0 %v941
        %v1084 = vpop.f32.mrb[0].mxu0
        %v1085 = vadd.f32 %v868, %v1084
        %v1086 = vpop.f32.mrb[0].mxu0
        %v1087 = vadd.f32 %v868, %v1086
        %1088 = vmatprep.mubr.f32.mxu0 0.0
        %1089 = vmatmul.mubr.f32.gmra.mrb[0].mxu0 %v944
        %v1090 = vpop.f32.mrb[0].mxu0
        %v1091 = vadd.f32 %v873, %v1090
        %v1092 = vpop.f32.mrb[0].mxu0
        %v1093 = vadd.f32 %v873, %v1092
        %1094 = vmatprep.mubr.f32.mxu0 0.0
        %1095 = vmatmul.mubr.f32.gmra.mrb[0].mxu0 %v947
        %v1096 = vpop.f32.mrb[0].mxu0
        %v1097 = vadd.f32 %v878, %v1096
        %v1098 = vpop.f32.mrb[0].mxu0
        %v1099 = vadd.f32 %v878, %v1098
        %1100 = vmatprep.mubr.f32.mxu0 0.0
        %1101 = vmatmul.mubr.f32.gmra.mrb[0].mxu0 %v950
        %v1102 = vpop.f32.mrb[0].mxu0
        %v1103 = vadd.f32 %v883, %v1102
        %v1104 = vpop.f32.mrb[0].mxu0
        %v1105 = vadd.f32 %v883, %v1104
        %1106 = vmatprep.mubr.f32.mxu0 0.0
        %1107 = vmatmul.mubr.f32.gmra.mrb[0].mxu0 %v953
        %v1108 = vpop.f32.mrb[0].mxu0
        %v1109 = vadd.f32 %v888, %v1108
        %v1110 = vpop.f32.mrb[0].mxu0
        %v1111 = vadd.f32 %v888, %v1110
        %1112 = vmatprep.mubr.f32.mxu0 0.0
        %1113 = vmatmul.mubr.f32.gmra.mrb[0].mxu0 %v956
        %v1114 = vpop.f32.mrb[0].mxu0
        %v1115 = vadd.f32 %v893, %v1114
        %v1116 = vpop.f32.mrb[0].mxu0
        %v1117 = vadd.f32 %v893, %v1116
        %1118 = vmatprep.mubr.f32.mxu0 0.0
        %1119 = vmatmul.mubr.f32.gmra.mrb[0].mxu0 %v959
        %v1120 = vpop.f32.mrb[0].mxu0
        %v1121 = vadd.f32 %v898, %v1120
        %v1122 = vpop.f32.mrb[0].mxu0
        %v1123 = vadd.f32 %v898, %v1122
        %1124 = vmatprep.mubr.f32.mxu0 0.0
        %1125 = vmatmul.mubr.f32.gmra.mrb[0].mxu0 %v962
        %v1126 = vpop.f32.mrb[0].mxu0
        %v1127 = vadd.f32 %v903, %v1126
        %v1128 = vpop.f32.mrb[0].mxu0
        %v1129 = vadd.f32 %v903, %v1128
        %1130 = vmatprep.mubr.f32.mxu0 0.0
        %1131 = vmatmul.mubr.f32.gmra.mrb[0].mxu0 %v965
        %v1132 = vpop.f32.mrb[0].mxu0
        %v1133 = vadd.f32 %v908, %v1132
        %v1134 = vpop.f32.mrb[0].mxu0
        %v1135 = vadd.f32 %v908, %v1134
        %1136 = vmatprep.mubr.f32.mxu0 0.0
        %1137 = vmatmul.mubr.f32.gmra.mrb[0].mxu0 %v968
        %v1138 = vpop.f32.mrb[0].mxu0
        %v1139 = vadd.f32 %v913, %v1138
        %v1140 = vpop.f32.mrb[0].mxu0
        %v1141 = vadd.f32 %v913, %v1140
        %1142 = vdwg.mxu0
        %1143 = vmatprep.subr.mxu0 %v609
        %1144 = vmatpush1.msra.mxu0 %v607
        %1145 = vmatprep.subr.mxu0 %v615
        %1146 = vmatpush1.msra.mxu0 %v613
        %1147 = vmatprep.subr.mxu0 %v621
        %1148 = vmatpush1.msra.mxu0 %v619
        %1149 = vmatprep.subr.mxu0 0.0
        %1150 = vmatpush1.msra.mxu0 0.0
        %1151 = vmatprep.subr.mxu0 0.0
        %1152 = vmatpush1.msra.mxu0 0.0
        %1153 = vmatprep.subr.mxu0 0.0
        %1154 = vmatpush1.msra.mxu0 0.0
        %1155 = vmatprep.subr.mxu0 0.0
        %1156 = vmatpush1.msra.mxu0 0.0
        %1157 = vmatprep.subr.mxu0 0.0
        %1158 = vmatpush1.msra.mxu0 0.0
        %1159 = vmatprep.subr.mxu0 0.0
        %1160 = vmatpush1.msra.mxu0 0.0
        %1161 = vmatprep.subr.mxu0 0.0
        %1162 = vmatpush1.msra.mxu0 0.0
        %1163 = vmatprep.subr.mxu0 0.0
        %1164 = vmatpush1.msra.mxu0 0.0
        %1165 = vmatprep.subr.mxu0 0.0
        %1166 = vmatpush1.msra.mxu0 0.0
        %1167 = vmatprep.subr.mxu0 0.0
        %1168 = vmatpush1.msra.mxu0 0.0
        %1169 = vmatprep.subr.mxu0 0.0
        %1170 = vmatpush1.msra.mxu0 0.0
        %1171 = vmatprep.subr.mxu0 0.0
        %1172 = vmatpush1.msra.mxu0 0.0
        %1173 = vmatprep.subr.mxu0 0.0
        %1174 = vmatpush1.msra.mxu0 0.0
        %1175 = vmatprep.subr.mxu0 0.0
        %1176 = vmatpush1.msra.mxu0 0.0
        %1177 = vmatprep.subr.mxu0 0.0
        %1178 = vmatpush1.msra.mxu0 0.0
        %1179 = vmatprep.subr.mxu0 0.0
        %1180 = vmatpush1.msra.mxu0 0.0
        %1181 = vmatprep.subr.mxu0 0.0
        %1182 = vmatpush1.msra.mxu0 0.0
        %1183 = vmatprep.subr.mxu0 0.0
        %1184 = vmatpush1.msra.mxu0 0.0
        %1185 = vmatprep.subr.mxu0 0.0
        %1186 = vmatpush1.msra.mxu0 0.0
        %1187 = vmatprep.subr.mxu0 0.0
        %1188 = vmatpush1.msra.mxu0 0.0
        %1189 = vmatprep.subr.mxu0 0.0
        %1190 = vmatpush1.msra.mxu0 0.0
        %1191 = vmatprep.subr.mxu0 0.0
        %1192 = vmatpush1.msra.mxu0 0.0
        %1193 = vmatprep.subr.mxu0 0.0
        %1194 = vmatpush1.msra.mxu0 0.0
        %1195 = vmatprep.subr.mxu0 0.0
        %1196 = vmatpush1.msra.mxu0 0.0
        %1197 = vmatprep.subr.mxu0 0.0
        %1198 = vmatpush1.msra.mxu0 0.0
        %1199 = vmatprep.subr.mxu0 0.0
        %1200 = vmatpush1.msra.mxu0 0.0
        %1201 = vmatprep.subr.mxu0 0.0
        %1202 = vmatpush1.msra.mxu0 0.0
        %1203 = vmatprep.subr.mxu0 0.0
        %1204 = vmatpush1.msra.mxu0 0.0
        %1205 = vmatprep.subr.mxu0 0.0
        %1206 = vmatpush1.msra.mxu0 0.0
        %1207 = vmatprep.mubr.f32.mxu0 0.0
        %1208 = vmatmul.mubr.f32.gmra.mrb[0].mxu0 %v917
        %v1209 = vpop.f32.mrb[0].mxu0
        %v1210 = vadd.f32 %v828, %v1209
        %v1211 = vpop.f32.mrb[0].mxu0
        %v1212 = vadd.f32 %v828, %v1211
        %1213 = vmatprep.mubr.f32.mxu0 0.0
        %1214 = vmatmul.mubr.f32.gmra.mrb[0].mxu0 %v920
        %v1215 = vpop.f32.mrb[0].mxu0
        %v1216 = vadd.f32 %v833, %v1215
        %v1217 = vpop.f32.mrb[0].mxu0
        %v1218 = vadd.f32 %v833, %v1217
        %1219 = vmatprep.mubr.f32.mxu0 0.0
        %1220 = vmatmul.mubr.f32.gmra.mrb[0].mxu0 %v923
        %v1221 = vpop.f32.mrb[0].mxu0
        %v1222 = vadd.f32 %v838, %v1221
        %v1223 = vpop.f32.mrb[0].mxu0
        %v1224 = vadd.f32 %v838, %v1223
        %1225 = vmatprep.mubr.f32.mxu0 0.0
        %1226 = vmatmul.mubr.f32.gmra.mrb[0].mxu0 %v926
        %v1227 = vpop.f32.mrb[0].mxu0
        %v1228 = vadd.f32 %v843, %v1227
        %v1229 = vpop.f32.mrb[0].mxu0
        %v1230 = vadd.f32 %v843, %v1229
        %1231 = vmatprep.mubr.f32.mxu0 0.0
        %1232 = vmatmul.mubr.f32.gmra.mrb[0].mxu0 %v929
        %v1233 = vpop.f32.mrb[0].mxu0
        %v1234 = vadd.f32 %v848, %v1233
        %v1235 = vpop.f32.mrb[0].mxu0
        %v1236 = vadd.f32 %v848, %v1235
        %1237 = vmatprep.mubr.f32.mxu0 0.0
        %1238 = vmatmul.mubr.f32.gmra.mrb[0].mxu0 %v932
        %v1239 = vpop.f32.mrb[0].mxu0
        %v1240 = vadd.f32 %v853, %v1239
        %v1241 = vpop.f32.mrb[0].mxu0
        %v1242 = vadd.f32 %v853, %v1241
        %1243 = vmatprep.mubr.f32.mxu0 0.0
        %1244 = vmatmul.mubr.f32.gmra.mrb[0].mxu0 %v935
        %v1245 = vpop.f32.mrb[0].mxu0
        %v1246 = vadd.f32 %v858, %v1245
        %v1247 = vpop.f32.mrb[0].mxu0
        %v1248 = vadd.f32 %v858, %v1247
        %1249 = vmatprep.mubr.f32.mxu0 0.0
        %1250 = vmatmul.mubr.f32.gmra.mrb[0].mxu0 %v938
        %v1251 = vpop.f32.mrb[0].mxu0
        %v1252 = vadd.f32 %v863, %v1251
        %v1253 = vpop.f32.mrb[0].mxu0
        %v1254 = vadd.f32 %v863, %v1253
        %1255 = vmatprep.mubr.f32.mxu0 0.0
        %1256 = vmatmul.mubr.f32.gmra.mrb[0].mxu0 %v941
        %v1257 = vpop.f32.mrb[0].mxu0
        %v1258 = vadd.f32 %v868, %v1257
        %v1259 = vpop.f32.mrb[0].mxu0
        %v1260 = vadd.f32 %v868, %v1259
        %1261 = vmatprep.mubr.f32.mxu0 0.0
        %1262 = vmatmul.mubr.f32.gmra.mrb[0].mxu0 %v944
        %v1263 = vpop.f32.mrb[0].mxu0
        %v1264 = vadd.f32 %v873, %v1263
        %v1265 = vpop.f32.mrb[0].mxu0
        %v1266 = vadd.f32 %v873, %v1265
        %1267 = vmatprep.mubr.f32.mxu0 0.0
        %1268 = vmatmul.mubr.f32.gmra.mrb[0].mxu0 %v947
        %v1269 = vpop.f32.mrb[0].mxu0
        %v1270 = vadd.f32 %v878, %v1269
        %v1271 = vpop.f32.mrb[0].mxu0
        %v1272 = vadd.f32 %v878, %v1271
        %1273 = vmatprep.mubr.f32.mxu0 0.0
        %1274 = vmatmul.mubr.f32.gmra.mrb[0].mxu0 %v950
        %v1275 = vpop.f32.mrb[0].mxu0
        %v1276 = vadd.f32 %v883, %v1275
        %v1277 = vpop.f32.mrb[0].mxu0
        %v1278 = vadd.f32 %v883, %v1277
        %1279 = vmatprep.mubr.f32.mxu0 0.0
        %1280 = vmatmul.mubr.f32.gmra.mrb[0].mxu0 %v953
        %v1281 = vpop.f32.mrb[0].mxu0
        %v1282 = vadd.f32 %v888, %v1281
        %v1283 = vpop.f32.mrb[0].mxu0
        %v1284 = vadd.f32 %v888, %v1283
        %1285 = vmatprep.mubr.f32.mxu0 0.0
        %1286 = vmatmul.mubr.f32.gmra.mrb[0].mxu0 %v956
        %v1287 = vpop.f32.mrb[0].mxu0
        %v1288 = vadd.f32 %v893, %v1287
        %v1289 = vpop.f32.mrb[0].mxu0
        %v1290 = vadd.f32 %v893, %v1289
        %1291 = vmatprep.mubr.f32.mxu0 0.0
        %1292 = vmatmul.mubr.f32.gmra.mrb[0].mxu0 %v959
        %v1293 = vpop.f32.mrb[0].mxu0
        %v1294 = vadd.f32 %v898, %v1293
        %v1295 = vpop.f32.mrb[0].mxu0
        %v1296 = vadd.f32 %v898, %v1295
        %1297 = vmatprep.mubr.f32.mxu0 0.0
        %1298 = vmatmul.mubr.f32.gmra.mrb[0].mxu0 %v962
        %v1299 = vpop.f32.mrb[0].mxu0
        %v1300 = vadd.f32 %v903, %v1299
        %v1301 = vpop.f32.mrb[0].mxu0
        %v1302 = vadd.f32 %v903, %v1301
        %1303 = vmatprep.mubr.f32.mxu0 0.0
        %1304 = vmatmul.mubr.f32.gmra.mrb[0].mxu0 %v965
        %v1305 = vpop.f32.mrb[0].mxu0
        %v1306 = vadd.f32 %v908, %v1305
        %v1307 = vpop.f32.mrb[0].mxu0
        %v1308 = vadd.f32 %v908, %v1307
        %1309 = vmatprep.mubr.f32.mxu0 0.0
        %1310 = vmatmul.mubr.f32.gmra.mrb[0].mxu0 %v968
        %v1311 = vpop.f32.mrb[0].mxu0
        %v1312 = vadd.f32 %v913, %v1311
        %v1313 = vpop.f32.mrb[0].mxu0
        %v1314 = vadd.f32 %v913, %v1313
        %1315 = vdwg.mxu0
        %1316 = vmatprep.subr.mxu0 %v692
        %1317 = vmatpush1.msra.mxu0 %v690
        %1318 = vmatprep.subr.mxu0 %v698
        %1319 = vmatpush1.msra.mxu0 %v696
        %1320 = vmatprep.subr.mxu0 %v704
        %1321 = vmatpush1.msra.mxu0 %v702
        %1322 = vmatprep.subr.mxu0 0.0
        %1323 = vmatpush1.msra.mxu0 0.0
        %1324 = vmatprep.subr.mxu0 0.0
        %1325 = vmatpush1.msra.mxu0 0.0
        %1326 = vmatprep.subr.mxu0 0.0
        %1327 = vmatpush1.msra.mxu0 0.0
        %1328 = vmatprep.subr.mxu0 0.0
        %1329 = vmatpush1.msra.mxu0 0.0
        %1330 = vmatprep.subr.mxu0 0.0
        %1331 = vmatpush1.msra.mxu0 0.0
        %1332 = vmatprep.subr.mxu0 0.0
        %1333 = vmatpush1.msra.mxu0 0.0
        %1334 = vmatprep.subr.mxu0 0.0
        %1335 = vmatpush1.msra.mxu0 0.0
        %1336 = vmatprep.subr.mxu0 0.0
        %1337 = vmatpush1.msra.mxu0 0.0
        %1338 = vmatprep.subr.mxu0 0.0
        %1339 = vmatpush1.msra.mxu0 0.0
        %1340 = vmatprep.subr.mxu0 0.0
        %1341 = vmatpush1.msra.mxu0 0.0
        %1342 = vmatprep.subr.mxu0 0.0
        %1343 = vmatpush1.msra.mxu0 0.0
        %1344 = vmatprep.subr.mxu0 0.0
        %1345 = vmatpush1.msra.mxu0 0.0
        %1346 = vmatprep.subr.mxu0 0.0
        %1347 = vmatpush1.msra.mxu0 0.0
        %1348 = vmatprep.subr.mxu0 0.0
        %1349 = vmatpush1.msra.mxu0 0.0
        %1350 = vmatprep.subr.mxu0 0.0
        %1351 = vmatpush1.msra.mxu0 0.0
        %1352 = vmatprep.subr.mxu0 0.0
        %1353 = vmatpush1.msra.mxu0 0.0
        %1354 = vmatprep.subr.mxu0 0.0
        %1355 = vmatpush1.msra.mxu0 0.0
        %1356 = vmatprep.subr.mxu0 0.0
        %1357 = vmatpush1.msra.mxu0 0.0
        %1358 = vmatprep.subr.mxu0 0.0
        %1359 = vmatpush1.msra.mxu0 0.0
        %1360 = vmatprep.subr.mxu0 0.0
        %1361 = vmatpush1.msra.mxu0 0.0
        %1362 = vmatprep.subr.mxu0 0.0
        %1363 = vmatpush1.msra.mxu0 0.0
        %1364 = vmatprep.subr.mxu0 0.0
        %1365 = vmatpush1.msra.mxu0 0.0
        %1366 = vmatprep.subr.mxu0 0.0
        %1367 = vmatpush1.msra.mxu0 0.0
        %1368 = vmatprep.subr.mxu0 0.0
        %1369 = vmatpush1.msra.mxu0 0.0
        %1370 = vmatprep.subr.mxu0 0.0
        %1371 = vmatpush1.msra.mxu0 0.0
        %1372 = vmatprep.subr.mxu0 0.0
        %1373 = vmatpush1.msra.mxu0 0.0
        %1374 = vmatprep.subr.mxu0 0.0
        %1375 = vmatpush1.msra.mxu0 0.0
        %1376 = vmatprep.subr.mxu0 0.0
        %1377 = vmatpush1.msra.mxu0 0.0
        %1378 = vmatprep.subr.mxu0 0.0
        %1379 = vmatpush1.msra.mxu0 0.0
        %1380 = vmatprep.mubr.f32.mxu0 0.0
        %1381 = vmatmul.mubr.f32.gmra.mrb[0].mxu0 %v917
        %v1382 = vpop.f32.mrb[0].mxu0
        %v1383 = vadd.f32 %v828, %v1382
        %v1384 = vpop.f32.mrb[0].mxu0
        %v1385 = vadd.f32 %v828, %v1384
        %1386 = vmatprep.mubr.f32.mxu0 0.0
        %1387 = vmatmul.mubr.f32.gmra.mrb[0].mxu0 %v920
        %v1388 = vpop.f32.mrb[0].mxu0
        %v1389 = vadd.f32 %v833, %v1388
        %v1390 = vpop.f32.mrb[0].mxu0
        %v1391 = vadd.f32 %v833, %v1390
        %1392 = vmatprep.mubr.f32.mxu0 0.0
        %1393 = vmatmul.mubr.f32.gmra.mrb[0].mxu0 %v923
        %v1394 = vpop.f32.mrb[0].mxu0
        %v1395 = vadd.f32 %v838, %v1394
        %v1396 = vpop.f32.mrb[0].mxu0
        %v1397 = vadd.f32 %v838, %v1396
        %1398 = vmatprep.mubr.f32.mxu0 0.0
        %1399 = vmatmul.mubr.f32.gmra.mrb[0].mxu0 %v926
        %v1400 = vpop.f32.mrb[0].mxu0
        %v1401 = vadd.f32 %v843, %v1400
        %v1402 = vpop.f32.mrb[0].mxu0
        %v1403 = vadd.f32 %v843, %v1402
        %1404 = vmatprep.mubr.f32.mxu0 0.0
        %1405 = vmatmul.mubr.f32.gmra.mrb[0].mxu0 %v929
        %v1406 = vpop.f32.mrb[0].mxu0
        %v1407 = vadd.f32 %v848, %v1406
        %v1408 = vpop.f32.mrb[0].mxu0
        %v1409 = vadd.f32 %v848, %v1408
        %1410 = vmatprep.mubr.f32.mxu0 0.0
        %1411 = vmatmul.mubr.f32.gmra.mrb[0].mxu0 %v932
        %v1412 = vpop.f32.mrb[0].mxu0
        %v1413 = vadd.f32 %v853, %v1412
        %v1414 = vpop.f32.mrb[0].mxu0
        %v1415 = vadd.f32 %v853, %v1414
        %1416 = vmatprep.mubr.f32.mxu0 0.0
        %1417 = vmatmul.mubr.f32.gmra.mrb[0].mxu0 %v935
        %v1418 = vpop.f32.mrb[0].mxu0
        %v1419 = vadd.f32 %v858, %v1418
        %v1420 = vpop.f32.mrb[0].mxu0
        %v1421 = vadd.f32 %v858, %v1420
        %1422 = vmatprep.mubr.f32.mxu0 0.0
        %1423 = vmatmul.mubr.f32.gmra.mrb[0].mxu0 %v938
        %v1424 = vpop.f32.mrb[0].mxu0
        %v1425 = vadd.f32 %v863, %v1424
        %v1426 = vpop.f32.mrb[0].mxu0
        %v1427 = vadd.f32 %v863, %v1426
        %1428 = vmatprep.mubr.f32.mxu0 0.0
        %1429 = vmatmul.mubr.f32.gmra.mrb[0].mxu0 %v941
        %v1430 = vpop.f32.mrb[0].mxu0
        %v1431 = vadd.f32 %v868, %v1430
        %v1432 = vpop.f32.mrb[0].mxu0
        %v1433 = vadd.f32 %v868, %v1432
        %1434 = vmatprep.mubr.f32.mxu0 0.0
        %1435 = vmatmul.mubr.f32.gmra.mrb[0].mxu0 %v944
        %v1436 = vpop.f32.mrb[0].mxu0
        %v1437 = vadd.f32 %v873, %v1436
        %v1438 = vpop.f32.mrb[0].mxu0
        %v1439 = vadd.f32 %v873, %v1438
        %1440 = vmatprep.mubr.f32.mxu0 0.0
        %1441 = vmatmul.mubr.f32.gmra.mrb[0].mxu0 %v947
        %v1442 = vpop.f32.mrb[0].mxu0
        %v1443 = vadd.f32 %v878, %v1442
        %v1444 = vpop.f32.mrb[0].mxu0
        %v1445 = vadd.f32 %v878, %v1444
        %1446 = vmatprep.mubr.f32.mxu0 0.0
        %1447 = vmatmul.mubr.f32.gmra.mrb[0].mxu0 %v950
        %v1448 = vpop.f32.mrb[0].mxu0
        %v1449 = vadd.f32 %v883, %v1448
        %v1450 = vpop.f32.mrb[0].mxu0
        %v1451 = vadd.f32 %v883, %v1450
        %1452 = vmatprep.mubr.f32.mxu0 0.0
        %1453 = vmatmul.mubr.f32.gmra.mrb[0].mxu0 %v953
        %v1454 = vpop.f32.mrb[0].mxu0
        %v1455 = vadd.f32 %v888, %v1454
        %v1456 = vpop.f32.mrb[0].mxu0
        %v1457 = vadd.f32 %v888, %v1456
        %1458 = vmatprep.mubr.f32.mxu0 0.0
        %1459 = vmatmul.mubr.f32.gmra.mrb[0].mxu0 %v956
        %v1460 = vpop.f32.mrb[0].mxu0
        %v1461 = vadd.f32 %v893, %v1460
        %v1462 = vpop.f32.mrb[0].mxu0
        %v1463 = vadd.f32 %v893, %v1462
        %1464 = vmatprep.mubr.f32.mxu0 0.0
        %1465 = vmatmul.mubr.f32.gmra.mrb[0].mxu0 %v959
        %v1466 = vpop.f32.mrb[0].mxu0
        %v1467 = vadd.f32 %v898, %v1466
        %v1468 = vpop.f32.mrb[0].mxu0
        %v1469 = vadd.f32 %v898, %v1468
        %1470 = vmatprep.mubr.f32.mxu0 0.0
        %1471 = vmatmul.mubr.f32.gmra.mrb[0].mxu0 %v962
        %v1472 = vpop.f32.mrb[0].mxu0
        %v1473 = vadd.f32 %v903, %v1472
        %v1474 = vpop.f32.mrb[0].mxu0
        %v1475 = vadd.f32 %v903, %v1474
        %1476 = vmatprep.mubr.f32.mxu0 0.0
        %1477 = vmatmul.mubr.f32.gmra.mrb[0].mxu0 %v965
        %v1478 = vpop.f32.mrb[0].mxu0
        %v1479 = vadd.f32 %v908, %v1478
        %v1480 = vpop.f32.mrb[0].mxu0
        %v1481 = vadd.f32 %v908, %v1480
        %1482 = vmatprep.mubr.f32.mxu0 0.0
        %1483 = vmatmul.mubr.f32.gmra.mrb[0].mxu0 %v968
        %v1484 = vpop.f32.mrb[0].mxu0
        %v1485 = vadd.f32 %v913, %v1484
        %v1486 = vpop.f32.mrb[0].mxu0
        %v1487 = vadd.f32 %v913, %v1486
        %1488 = vdwg.mxu0
        %1489 = vmatprep.subr.mxu0 %v775
        %1490 = vmatpush1.msra.mxu0 %v773
        %1491 = vmatprep.subr.mxu0 %v781
        %1492 = vmatpush1.msra.mxu0 %v779
        %1493 = vmatprep.subr.mxu0 %v787
        %1494 = vmatpush1.msra.mxu0 %v785
        %1495 = vmatprep.subr.mxu0 0.0
        %1496 = vmatpush1.msra.mxu0 0.0
        %1497 = vmatprep.subr.mxu0 0.0
        %1498 = vmatpush1.msra.mxu0 0.0
        %1499 = vmatprep.subr.mxu0 0.0
        %1500 = vmatpush1.msra.mxu0 0.0
        %1501 = vmatprep.subr.mxu0 0.0
        %1502 = vmatpush1.msra.mxu0 0.0
        %1503 = vmatprep.subr.mxu0 0.0
        %1504 = vmatpush1.msra.mxu0 0.0
        %1505 = vmatprep.subr.mxu0 0.0
        %1506 = vmatpush1.msra.mxu0 0.0
        %1507 = vmatprep.subr.mxu0 0.0
        %1508 = vmatpush1.msra.mxu0 0.0
        %1509 = vmatprep.subr.mxu0 0.0
        %1510 = vmatpush1.msra.mxu0 0.0
        %1511 = vmatprep.subr.mxu0 0.0
        %1512 = vmatpush1.msra.mxu0 0.0
        %1513 = vmatprep.subr.mxu0 0.0
        %1514 = vmatpush1.msra.mxu0 0.0
        %1515 = vmatprep.subr.mxu0 0.0
        %1516 = vmatpush1.msra.mxu0 0.0
        %1517 = vmatprep.subr.mxu0 0.0
        %1518 = vmatpush1.msra.mxu0 0.0
        %1519 = vmatprep.subr.mxu0 0.0
        %1520 = vmatpush1.msra.mxu0 0.0
        %1521 = vmatprep.subr.mxu0 0.0
        %1522 = vmatpush1.msra.mxu0 0.0
        %1523 = vmatprep.subr.mxu0 0.0
        %1524 = vmatpush1.msra.mxu0 0.0
        %1525 = vmatprep.subr.mxu0 0.0
        %1526 = vmatpush1.msra.mxu0 0.0
        %1527 = vmatprep.subr.mxu0 0.0
        %1528 = vmatpush1.msra.mxu0 0.0
        %1529 = vmatprep.subr.mxu0 0.0
        %1530 = vmatpush1.msra.mxu0 0.0
        %1531 = vmatprep.subr.mxu0 0.0
        %1532 = vmatpush1.msra.mxu0 0.0
        %1533 = vmatprep.subr.mxu0 0.0
        %1534 = vmatpush1.msra.mxu0 0.0
        %1535 = vmatprep.subr.mxu0 0.0
        %1536 = vmatpush1.msra.mxu0 0.0
        %1537 = vmatprep.subr.mxu0 0.0
        %1538 = vmatpush1.msra.mxu0 0.0
        %1539 = vmatprep.subr.mxu0 0.0
        %1540 = vmatpush1.msra.mxu0 0.0
        %1541 = vmatprep.subr.mxu0 0.0
        %1542 = vmatpush1.msra.mxu0 0.0
        %1543 = vmatprep.subr.mxu0 0.0
        %1544 = vmatpush1.msra.mxu0 0.0
        %1545 = vmatprep.subr.mxu0 0.0
        %1546 = vmatpush1.msra.mxu0 0.0
        %1547 = vmatprep.subr.mxu0 0.0
        %1548 = vmatpush1.msra.mxu0 0.0
        %1549 = vmatprep.subr.mxu0 0.0
        %1550 = vmatpush1.msra.mxu0 0.0
        %1551 = vmatprep.subr.mxu0 0.0
        %1552 = vmatpush1.msra.mxu0 0.0
        %1553 = vmatprep.mubr.f32.mxu0 0.0
        %1554 = vmatmul.mubr.f32.gmra.mrb[0].mxu0 %v917
        %v1555 = vpop.f32.mrb[0].mxu0
        %v1556 = vadd.f32 %v828, %v1555
        %v1557 = vpop.f32.mrb[0].mxu0
        %v1558 = vadd.f32 %v828, %v1557
        %1559 = vmatprep.mubr.f32.mxu0 0.0
        %1560 = vmatmul.mubr.f32.gmra.mrb[0].mxu0 %v920
        %v1561 = vpop.f32.mrb[0].mxu0
        %v1562 = vadd.f32 %v833, %v1561
        %v1563 = vpop.f32.mrb[0].mxu0
        %v1564 = vadd.f32 %v833, %v1563
        %1565 = vmatprep.mubr.f32.mxu0 0.0
        %1566 = vmatmul.mubr.f32.gmra.mrb[0].mxu0 %v923
        %v1567 = vpop.f32.mrb[0].mxu0
        %v1568 = vadd.f32 %v838, %v1567
        %v1569 = vpop.f32.mrb[0].mxu0
        %v1570 = vadd.f32 %v838, %v1569
        %1571 = vmatprep.mubr.f32.mxu0 0.0
        %1572 = vmatmul.mubr.f32.gmra.mrb[0].mxu0 %v926
        %v1573 = vpop.f32.mrb[0].mxu0
        %v1574 = vadd.f32 %v843, %v1573
        %v1575 = vpop.f32.mrb[0].mxu0
        %v1576 = vadd.f32 %v843, %v1575
        %1577 = vmatprep.mubr.f32.mxu0 0.0
        %1578 = vmatmul.mubr.f32.gmra.mrb[0].mxu0 %v929
        %v1579 = vpop.f32.mrb[0].mxu0
        %v1580 = vadd.f32 %v848, %v1579
        %v1581 = vpop.f32.mrb[0].mxu0
        %v1582 = vadd.f32 %v848, %v1581
        %1583 = vmatprep.mubr.f32.mxu0 0.0
        %1584 = vmatmul.mubr.f32.gmra.mrb[0].mxu0 %v932
        %v1585 = vpop.f32.mrb[0].mxu0
        %v1586 = vadd.f32 %v853, %v1585
        %v1587 = vpop.f32.mrb[0].mxu0
        %v1588 = vadd.f32 %v853, %v1587
        %1589 = vmatprep.mubr.f32.mxu0 0.0
        %1590 = vmatmul.mubr.f32.gmra.mrb[0].mxu0 %v935
        %v1591 = vpop.f32.mrb[0].mxu0
        %v1592 = vadd.f32 %v858, %v1591
        %v1593 = vpop.f32.mrb[0].mxu0
        %v1594 = vadd.f32 %v858, %v1593
        %1595 = vmatprep.mubr.f32.mxu0 0.0
        %1596 = vmatmul.mubr.f32.gmra.mrb[0].mxu0 %v938
        %v1597 = vpop.f32.mrb[0].mxu0
        %v1598 = vadd.f32 %v863, %v1597
        %v1599 = vpop.f32.mrb[0].mxu0
        %v1600 = vadd.f32 %v863, %v1599
        %1601 = vmatprep.mubr.f32.mxu0 0.0
        %1602 = vmatmul.mubr.f32.gmra.mrb[0].mxu0 %v941
        %v1603 = vpop.f32.mrb[0].mxu0
        %v1604 = vadd.f32 %v868, %v1603
        %v1605 = vpop.f32.mrb[0].mxu0
        %v1606 = vadd.f32 %v868, %v1605
        %1607 = vmatprep.mubr.f32.mxu0 0.0
        %1608 = vmatmul.mubr.f32.gmra.mrb[0].mxu0 %v944
        %v1609 = vpop.f32.mrb[0].mxu0
        %v1610 = vadd.f32 %v873, %v1609
        %v1611 = vpop.f32.mrb[0].mxu0
        %v1612 = vadd.f32 %v873, %v1611
        %1613 = vmatprep.mubr.f32.mxu0 0.0
        %1614 = vmatmul.mubr.f32.gmra.mrb[0].mxu0 %v947
        %v1615 = vpop.f32.mrb[0].mxu0
        %v1616 = vadd.f32 %v878, %v1615
        %v1617 = vpop.f32.mrb[0].mxu0
        %v1618 = vadd.f32 %v878, %v1617
        %1619 = vmatprep.mubr.f32.mxu0 0.0
        %1620 = vmatmul.mubr.f32.gmra.mrb[0].mxu0 %v950
        %v1621 = vpop.f32.mrb[0].mxu0
        %v1622 = vadd.f32 %v883, %v1621
        %v1623 = vpop.f32.mrb[0].mxu0
        %v1624 = vadd.f32 %v883, %v1623
        %1625 = vmatprep.mubr.f32.mxu0 0.0
        %1626 = vmatmul.mubr.f32.gmra.mrb[0].mxu0 %v953
        %v1627 = vpop.f32.mrb[0].mxu0
        %v1628 = vadd.f32 %v888, %v1627
        %v1629 = vpop.f32.mrb[0].mxu0
        %v1630 = vadd.f32 %v888, %v1629
        %1631 = vmatprep.mubr.f32.mxu0 0.0
        %1632 = vmatmul.mubr.f32.gmra.mrb[0].mxu0 %v956
        %v1633 = vpop.f32.mrb[0].mxu0
        %v1634 = vadd.f32 %v893, %v1633
        %v1635 = vpop.f32.mrb[0].mxu0
        %v1636 = vadd.f32 %v893, %v1635
        %1637 = vmatprep.mubr.f32.mxu0 0.0
        %1638 = vmatmul.mubr.f32.gmra.mrb[0].mxu0 %v959
        %v1639 = vpop.f32.mrb[0].mxu0
        %v1640 = vadd.f32 %v898, %v1639
        %v1641 = vpop.f32.mrb[0].mxu0
        %v1642 = vadd.f32 %v898, %v1641
        %1643 = vmatprep.mubr.f32.mxu0 0.0
        %1644 = vmatmul.mubr.f32.gmra.mrb[0].mxu0 %v962
        %v1645 = vpop.f32.mrb[0].mxu0
        %v1646 = vadd.f32 %v903, %v1645
        %v1647 = vpop.f32.mrb[0].mxu0
        %v1648 = vadd.f32 %v903, %v1647
        %1649 = vmatprep.mubr.f32.mxu0 0.0
        %1650 = vmatmul.mubr.f32.gmra.mrb[0].mxu0 %v965
        %v1651 = vpop.f32.mrb[0].mxu0
        %v1652 = vadd.f32 %v908, %v1651
        %v1653 = vpop.f32.mrb[0].mxu0
        %v1654 = vadd.f32 %v908, %v1653
        %1655 = vmatprep.mubr.f32.mxu0 0.0
        %1656 = vmatmul.mubr.f32.gmra.mrb[0].mxu0 %v968
        %v1657 = vpop.f32.mrb[0].mxu0
        %v1658 = vadd.f32 %v913, %v1657
        %v1659 = vpop.f32.mrb[0].mxu0
        %v1660 = vadd.f32 %v913, %v1659
        %1661 = vdwg.mxu0
        %1662 = vst [vmem:[%s332] sm:$0xff] %v1037
        %1663 = vst [vmem:[%s332 + $0x8] sm:$0xff] %v1039
        %1664 = vst [vmem:[%s332 + $0x10] sm:$0xff] %v1210
        %1665 = vst [vmem:[%s332 + $0x18] sm:$0xff] %v1212
        %1666 = vst [vmem:[%s332 + $0x20] sm:$0xff] %v1383
        %1667 = vst [vmem:[%s332 + $0x28] sm:$0xff] %v1385
        %1668 = vst [vmem:[%s332 + $0x30] sm:$0xff] %v1556
        %1669 = vst [vmem:[%s332 + $0x38] sm:$0xff] %v1558
        %1670 = vst [vmem:[%s332 + $0x40] sm:$0xff] %v1043
        %1671 = vst [vmem:[%s332 + $0x48] sm:$0xff] %v1045
        %1672 = vst [vmem:[%s332 + $0x50] sm:$0xff] %v1216
        %1673 = vst [vmem:[%s332 + $0x58] sm:$0xff] %v1218
        %1674 = vst [vmem:[%s332 + $0x60] sm:$0xff] %v1389
        %1675 = vst [vmem:[%s332 + $0x68] sm:$0xff] %v1391
        %1676 = vst [vmem:[%s332 + $0x70] sm:$0xff] %v1562
        %1677 = vst [vmem:[%s332 + $0x78] sm:$0xff] %v1564
        %1678 = vst [vmem:[%s332 + $0x80] sm:$0xff] %v1049
        %1679 = vst [vmem:[%s332 + $0x88] sm:$0xff] %v1051
        %1680 = vst [vmem:[%s332 + $0x90] sm:$0xff] %v1222
        %1681 = vst [vmem:[%s332 + $0x98] sm:$0xff] %v1224
        %1682 = vst [vmem:[%s332 + $0xa0] sm:$0xff] %v1395
        %1683 = vst [vmem:[%s332 + $0xa8] sm:$0xff] %v1397
        %1684 = vst [vmem:[%s332 + $0xb0] sm:$0xff] %v1568
        %1685 = vst [vmem:[%s332 + $0xb8] sm:$0xff] %v1570
        %1686 = vst [vmem:[%s332 + $0xc0] sm:$0xff] %v1055
        %1687 = vst [vmem:[%s332 + $0xc8] sm:$0xff] %v1057
        %1688 = vst [vmem:[%s332 + $0xd0] sm:$0xff] %v1228
        %1689 = vst [vmem:[%s332 + $0xd8] sm:$0xff] %v1230
        %1690 = vst [vmem:[%s332 + $0xe0] sm:$0xff] %v1401
        %1691 = vst [vmem:[%s332 + $0xe8] sm:$0xff] %v1403
        %1692 = vst [vmem:[%s332 + $0xf0] sm:$0xff] %v1574
        %1693 = vst [vmem:[%s332 + $0xf8] sm:$0xff] %v1576
        %1694 = vst [vmem:[%s332 + $0x100] sm:$0xff] %v1061
        %1695 = vst [vmem:[%s332 + $0x108] sm:$0xff] %v1063
        %1696 = vst [vmem:[%s332 + $0x110] sm:$0xff] %v1234
        %1697 = vst [vmem:[%s332 + $0x118] sm:$0xff] %v1236
        %1698 = vst [vmem:[%s332 + $0x120] sm:$0xff] %v1407
        %1699 = vst [vmem:[%s332 + $0x128] sm:$0xff] %v1409
        %1700 = vst [vmem:[%s332 + $0x130] sm:$0xff] %v1580
        %1701 = vst [vmem:[%s332 + $0x138] sm:$0xff] %v1582
        %1702 = vst [vmem:[%s332 + $0x140] sm:$0xff] %v1067
        %1703 = vst [vmem:[%s332 + $0x148] sm:$0xff] %v1069
        %1704 = vst [vmem:[%s332 + $0x150] sm:$0xff] %v1240
        %1705 = vst [vmem:[%s332 + $0x158] sm:$0xff] %v1242
        %1706 = vst [vmem:[%s332 + $0x160] sm:$0xff] %v1413
        %1707 = vst [vmem:[%s332 + $0x168] sm:$0xff] %v1415
        %1708 = vst [vmem:[%s332 + $0x170] sm:$0xff] %v1586
        %1709 = vst [vmem:[%s332 + $0x178] sm:$0xff] %v1588
        %1710 = vst [vmem:[%s332 + $0x180] sm:$0xff] %v1073
        %1711 = vst [vmem:[%s332 + $0x188] sm:$0xff] %v1075
        %1712 = vst [vmem:[%s332 + $0x190] sm:$0xff] %v1246
        %1713 = vst [vmem:[%s332 + $0x198] sm:$0xff] %v1248
        %1714 = vst [vmem:[%s332 + $0x1a0] sm:$0xff] %v1419
        %1715 = vst [vmem:[%s332 + $0x1a8] sm:$0xff] %v1421
        %1716 = vst [vmem:[%s332 + $0x1b0] sm:$0xff] %v1592
        %1717 = vst [vmem:[%s332 + $0x1b8] sm:$0xff] %v1594
        %1718 = vst [vmem:[%s332 + $0x1c0] sm:$0xff] %v1079
        %1719 = vst [vmem:[%s332 + $0x1c8] sm:$0xff] %v1081
        %1720 = vst [vmem:[%s332 + $0x1d0] sm:$0xff] %v1252
        %1721 = vst [vmem:[%s332 + $0x1d8] sm:$0xff] %v1254
        %1722 = vst [vmem:[%s332 + $0x1e0] sm:$0xff] %v1425
        %1723 = vst [vmem:[%s332 + $0x1e8] sm:$0xff] %v1427
        %1724 = vst [vmem:[%s332 + $0x1f0] sm:$0xff] %v1598
        %1725 = vst [vmem:[%s332 + $0x1f8] sm:$0xff] %v1600
        %1726 = vst [vmem:[%s332 + $0x200] sm:$0xff] %v1085
        %1727 = vst [vmem:[%s332 + $0x208] sm:$0xff] %v1087
        %1728 = vst [vmem:[%s332 + $0x210] sm:$0xff] %v1258
        %1729 = vst [vmem:[%s332 + $0x218] sm:$0xff] %v1260
        %1730 = vst [vmem:[%s332 + $0x220] sm:$0xff] %v1431
        %1731 = vst [vmem:[%s332 + $0x228] sm:$0xff] %v1433
        %1732 = vst [vmem:[%s332 + $0x230] sm:$0xff] %v1604
        %1733 = vst [vmem:[%s332 + $0x238] sm:$0xff] %v1606
        %1734 = vst [vmem:[%s332 + $0x240] sm:$0xff] %v1091
        %1735 = vst [vmem:[%s332 + $0x248] sm:$0xff] %v1093
        %1736 = vst [vmem:[%s332 + $0x250] sm:$0xff] %v1264
        %1737 = vst [vmem:[%s332 + $0x258] sm:$0xff] %v1266
        %1738 = vst [vmem:[%s332 + $0x260] sm:$0xff] %v1437
        %1739 = vst [vmem:[%s332 + $0x268] sm:$0xff] %v1439
        %1740 = vst [vmem:[%s332 + $0x270] sm:$0xff] %v1610
        %1741 = vst [vmem:[%s332 + $0x278] sm:$0xff] %v1612
        %1742 = vst [vmem:[%s332 + $0x280] sm:$0xff] %v1097
        %1743 = vst [vmem:[%s332 + $0x288] sm:$0xff] %v1099
        %1744 = vst [vmem:[%s332 + $0x290] sm:$0xff] %v1270
        %1745 = vst [vmem:[%s332 + $0x298] sm:$0xff] %v1272
        %1746 = vst [vmem:[%s332 + $0x2a0] sm:$0xff] %v1443
        %1747 = vst [vmem:[%s332 + $0x2a8] sm:$0xff] %v1445
        %1748 = vst [vmem:[%s332 + $0x2b0] sm:$0xff] %v1616
        %1749 = vst [vmem:[%s332 + $0x2b8] sm:$0xff] %v1618
        %1750 = vst [vmem:[%s332 + $0x2c0] sm:$0xff] %v1103
        %1751 = vst [vmem:[%s332 + $0x2c8] sm:$0xff] %v1105
        %1752 = vst [vmem:[%s332 + $0x2d0] sm:$0xff] %v1276
        %1753 = vst [vmem:[%s332 + $0x2d8] sm:$0xff] %v1278
        %1754 = vst [vmem:[%s332 + $0x2e0] sm:$0xff] %v1449
        %1755 = vst [vmem:[%s332 + $0x2e8] sm:$0xff] %v1451
        %1756 = vst [vmem:[%s332 + $0x2f0] sm:$0xff] %v1622
        %1757 = vst [vmem:[%s332 + $0x2f8] sm:$0xff] %v1624
        %1758 = vst [vmem:[%s332 + $0x300] sm:$0xff] %v1109
        %1759 = vst [vmem:[%s332 + $0x308] sm:$0xff] %v1111
        %1760 = vst [vmem:[%s332 + $0x310] sm:$0xff] %v1282
        %1761 = vst [vmem:[%s332 + $0x318] sm:$0xff] %v1284
        %1762 = vst [vmem:[%s332 + $0x320] sm:$0xff] %v1455
        %1763 = vst [vmem:[%s332 + $0x328] sm:$0xff] %v1457
        %1764 = vst [vmem:[%s332 + $0x330] sm:$0xff] %v1628
        %1765 = vst [vmem:[%s332 + $0x338] sm:$0xff] %v1630
        %1766 = vst [vmem:[%s332 + $0x340] sm:$0xff] %v1115
        %1767 = vst [vmem:[%s332 + $0x348] sm:$0xff] %v1117
        %1768 = vst [vmem:[%s332 + $0x350] sm:$0xff] %v1288
        %1769 = vst [vmem:[%s332 + $0x358] sm:$0xff] %v1290
        %1770 = vst [vmem:[%s332 + $0x360] sm:$0xff] %v1461
        %1771 = vst [vmem:[%s332 + $0x368] sm:$0xff] %v1463
        %1772 = vst [vmem:[%s332 + $0x370] sm:$0xff] %v1634
        %1773 = vst [vmem:[%s332 + $0x378] sm:$0xff] %v1636
        %1774 = vst [vmem:[%s332 + $0x380] sm:$0xff] %v1121
        %1775 = vst [vmem:[%s332 + $0x388] sm:$0xff] %v1123
        %1776 = vst [vmem:[%s332 + $0x390] sm:$0xff] %v1294
        %1777 = vst [vmem:[%s332 + $0x398] sm:$0xff] %v1296
        %1778 = vst [vmem:[%s332 + $0x3a0] sm:$0xff] %v1467
        %1779 = vst [vmem:[%s332 + $0x3a8] sm:$0xff] %v1469
        %1780 = vst [vmem:[%s332 + $0x3b0] sm:$0xff] %v1640
        %1781 = vst [vmem:[%s332 + $0x3b8] sm:$0xff] %v1642
        %1782 = vst [vmem:[%s332 + $0x3c0] sm:$0xff] %v1127
        %1783 = vst [vmem:[%s332 + $0x3c8] sm:$0xff] %v1129
        %1784 = vst [vmem:[%s332 + $0x3d0] sm:$0xff] %v1300
        %1785 = vst [vmem:[%s332 + $0x3d8] sm:$0xff] %v1302
        %1786 = vst [vmem:[%s332 + $0x3e0] sm:$0xff] %v1473
        %1787 = vst [vmem:[%s332 + $0x3e8] sm:$0xff] %v1475
        %1788 = vst [vmem:[%s332 + $0x3f0] sm:$0xff] %v1646
        %1789 = vst [vmem:[%s332 + $0x3f8] sm:$0xff] %v1648
        %1790 = vst [vmem:[%s332 + $0x400] sm:$0xff] %v1133
        %1791 = vst [vmem:[%s332 + $0x408] sm:$0xff] %v1135
        %1792 = vst [vmem:[%s332 + $0x410] sm:$0xff] %v1306
        %1793 = vst [vmem:[%s332 + $0x418] sm:$0xff] %v1308
        %1794 = vst [vmem:[%s332 + $0x420] sm:$0xff] %v1479
        %1795 = vst [vmem:[%s332 + $0x428] sm:$0xff] %v1481
        %1796 = vst [vmem:[%s332 + $0x430] sm:$0xff] %v1652
        %1797 = vst [vmem:[%s332 + $0x438] sm:$0xff] %v1654
        %1798 = vst [vmem:[%s332 + $0x440] sm:$0xff] %v1139
        %1799 = vst [vmem:[%s332 + $0x448] sm:$0xff] %v1141
        %1800 = vst [vmem:[%s332 + $0x450] sm:$0xff] %v1312
        %1801 = vst [vmem:[%s332 + $0x458] sm:$0xff] %v1314
        %1802 = vst [vmem:[%s332 + $0x460] sm:$0xff] %v1485
        %1803 = vst [vmem:[%s332 + $0x468] sm:$0xff] %v1487
        %1804 = vst [vmem:[%s332 + $0x470] sm:$0xff] %v1658
        %1805 = vst [vmem:[%s332 + $0x478] sm:$0xff] %v1660
        %s1806 = sand.u32 %s166, 1
        %s1807 = scalar_lea.sflag [#allocation4], %s1806
        %s1808 = sand.u32 %s166, 1
        %s1809 = smul.addr %s1808, 1152
        %s1810 = scalar_lea.vmem [#allocation8], %s1809
        // Predicated region
        $region53: #{tpu_custom_call.1} parent=39 // pred_check
          %p1811 = pneg %p176
        $region54: #{tpu_custom_call.1} parent=39 // pred_check_branch
          %1813 = sbr.rel (%p1811) target = $region56
        $region55: #{tpu_custom_call.1} parent=39 // pred_region
          %s1814 = smul.u32 8, %s30
          %s1815 = ssub.s32 25, %s1814
          %p1816 = scmp.lt.s32.totalorder %s1815, 8
          %s1817 = scalar_select %p1816, %s1815, 8
          %s1818 = smul.u32 2304, %s1817
          %s1820 = ssub.s32 18432, %s1818
          %1821 = vsyncadd %s1807, %s1820
          %p1822 = scmp.ne.s32.totalorder 0, %s1818
          %s1823 = smul.addr %s29, 450
          %s1824 = sadd.s32 %s1814, %s1823
          %s1825 = smul.addr %s1824, 128
          %s1826 = scalar_lea.hbm %s5, %s1825
          %s1827 = smul.u32 %s1817, 8
          %s1828 = smul.u32 %s1827, 18
          %s1829 = sshll.u32 %s1810, 4
          %s1830 = int_to_ptr.vmem [resolvable:$true] %s1829
          %s1831 = sshll.u32 %s1828, 4
          %1835 = dma.vmem_to_hbm [thread:$0]  (%p1822), %s1830, %s1831, %s1826, %s1807, 1024, 3200, %s1827
        $region56: #{tpu_custom_call.1} parent=39 // pred_fallthru
          _
      $region40: #{tpu_custom_call.1} parent=5 // pred_fallthru
        _
      %p1836 = scmp.le.s32.totalorder 2, %s20
      // Predicated region
      $region57: #{tpu_custom_call.1} parent=5 // pred_check
        %p1837 = pneg %p1836
      $region58: #{tpu_custom_call.1} parent=5 // pred_check_branch
        %1839 = sbr.rel (%p1837) target = $region60
      $region59: #{tpu_custom_call.1} parent=5 // pred_region
        %s1840 = ssub.s32 %s20, 2
        // Predicated region
        $region61: #{tpu_custom_call.1} parent=59 // pred_check
          %p1841 = pneg %p182
        $region62: #{tpu_custom_call.1} parent=59 // pred_check_branch
          %1843 = sbr.rel (%p1841) target = $region64
        $region63: #{tpu_custom_call.1} parent=59 // pred_region
          %s1844 = sand.u32 %s167, 1
          %s1845 = scalar_lea.sflag [#allocation4], %s1844
          %s1846 = sand.u32 %s167, 1
          %s1847 = smul.addr %s1846, 1152
          %s1848 = scalar_lea.vmem [#allocation8], %s1847
          %1849 = dma.done %s1845, 18432
        $region64: #{tpu_custom_call.1} parent=59 // pred_fallthru
          _
      $region60: #{tpu_custom_call.1} parent=5 // pred_fallthru
        _
    $region6: #{tpu_custom_call.1} parent=1 // loop_footer
      %s24 = sadd.s32 1, %s20
    $region7: #{tpu_custom_call.1} parent=1 // loop_footer_branch
      %19 = sbr.rel target = $region3
    $region8: #{tpu_custom_call.1} parent=1 // loop_exit
      _
    %1850 = vsyncpa [#allocation3], 1
    %s1851 = scalar_lea.sflag [#allocation3], 1
    %1852 = vsyncpa %s1851, 1
    %1853 = vsyncpa [#allocation6], 1
    %s1854 = scalar_lea.sflag [#allocation6], 1
    %1855 = vsyncpa %s1854, 1
    %1856 = vsyncpa [#allocation4], 1
    %s1857 = scalar_lea.sflag [#allocation4], 1
    %1858 = vsyncpa %s1857, 1

</llo_original>
